<compile_context>
chip_gen: v7x
topology: tpu7x:2x2x1
jax: 0.10.0
libtpu: 0.0.40
codegen_flags: <defaults>
</compile_context>

<pallas_src>
import functools

import jax
import jax.numpy as jnp
from jax.experimental import pallas as pl
from jax.experimental.pallas import tpu as pltpu

_VMEM_LIMIT_BYTES = 32 * 1024 * 1024     # explicit scoped-VMEM cap (blocks sized well below it)
_BLOCK_BUDGET_BYTES = 2 * 1024 * 1024    # target bytes for one (C, TILE) activation block


def _round_up(x: int, m: int) -> int:
    return ((x + m - 1) // m) * m


def _pick_spatial_tile(hw: int, rows: int, bytes_per_elem: int = 4):
    """Pick a lane tile (multiple of 128) for the flattened spatial axis.

    Returns (tile, hw_padded) with hw_padded % tile == 0, minimal zero padding, and
    rows * tile * bytes_per_elem <= _BLOCK_BUDGET_BYTES (so double-buffered blocks fit
    comfortably in VMEM on v5e/v6e/v7x)."""
    hw128 = _round_up(hw, 128)
    units = hw128 // 128
    max_units = max(1, _BLOCK_BUDGET_BYTES // (rows * bytes_per_elem * 128))
    tile_units = 1
    for d in range(1, units + 1):
        if units % d == 0 and d <= max_units:
            tile_units = d
    return 128 * tile_units, hw128


def _apply_act(x, nl: str):
    if nl == "RE":
        return jnp.maximum(x, 0.0)
    if nl == "HS":  # Hswish: x * relu6(x + 3) / 6
        return x * (jnp.clip(x + 3.0, 0.0, 6.0) * (1.0 / 6.0))
    raise NotImplementedError(nl)


def _fold_bn(gamma, beta, mean, var, eps):
    scale = gamma / jnp.sqrt(var + eps)
    shift = beta - mean * scale
    return (scale.reshape(-1, 1).astype(jnp.float32),
            shift.reshape(-1, 1).astype(jnp.float32))


# ---------------------------------------------------------------------------
# Kernels
# ---------------------------------------------------------------------------
def _pw_conv_bn_act_kernel(x_ref, w_ref, scale_ref, shift_ref, o_ref, *, nl):
    # x_ref: (1, Cin, T) ; w_ref: (Cout, Cin) ; scale/shift: (Cout, 1) ; o_ref: (1, Cout, T)
    y = jnp.dot(w_ref[...], x_ref[0], preferred_element_type=jnp.float32)
    y = y * scale_ref[...] + shift_ref[...]
    o_ref[0] = _apply_act(y, nl).astype(o_ref.dtype)


def _dw_conv_bn_kernel(xp_ref, w_ref, scale_ref, shift_ref, o_ref, *, k, wp, lout):
    # xp_ref: (1, C, Hp*Wp + k - 1) zero-padded sample (flattened 2D "same" padding, plus a
    #         k-1 tail so the largest tap offset stays in bounds)
    # w_ref:  (C, k*k) depthwise taps ; scale/shift: (C, 1) ; o_ref: (1, C, H*Wp)
    # Stride-1 "same" depthwise conv; columns >= W per output row are junk and sliced off
    # in the wrapper (stride-2 is a wrapper-side subsample of the stride-1 output).
    x = xp_ref[0]
    c = x.shape[0]
    acc = jnp.zeros((c, lout), jnp.float32)
    for dy in range(k):
        for dx in range(k):
            off = dy * wp + dx
            tap = dy * k + dx
            acc = acc + w_ref[:, tap:tap + 1] * x[:, off:off + lout]
    o_ref[0] = (acc * scale_ref[...] + shift_ref[...]).astype(o_ref.dtype)


def _se_gate_kernel(z_ref, w1t_ref, w2_ref, g_ref, *, inv_hw):
    # z_ref: (1, C, HWo_pad) zero-padded ; w1t_ref: (C, Cr) = fc1.weight.T ; w2_ref: (C, Cr) = fc2.weight
    pooled = jnp.sum(z_ref[0], axis=1, keepdims=True) * inv_hw      # (C, 1) global avg pool
    h = jnp.sum(w1t_ref[...] * pooled, axis=0, keepdims=True)       # (1, Cr) fc1
    h = jnp.maximum(h, 0.0)                                         # ReLU
    s = jnp.sum(w2_ref[...] * h, axis=1, keepdims=True)             # (C, 1) fc2
    g_ref[0] = (jnp.clip(s + 3.0, 0.0, 6.0) * (1.0 / 6.0)).astype(g_ref.dtype)  # Hsigmoid


def _se_act_pw_conv_bn_kernel(z_ref, g_ref, w_ref, scale_ref, shift_ref, *rest, nl, use_res):
    # z_ref: (1, Cexp, T) ; g_ref: (1, Cexp, 1) ; w_ref: (Coup, Cexp) ; scale/shift: (Coup, 1)
    # rest = (res_ref, o_ref) if use_res else (o_ref,)
    if use_res:
        res_ref, o_ref = rest
    else:
        (o_ref,) = rest
    a = _apply_act(z_ref[0] * g_ref[0], nl)                          # SE scale + nonlinearity
    y = jnp.dot(w_ref[...], a, preferred_element_type=jnp.float32)   # 1x1 projection
    y = y * scale_ref[...] + shift_ref[...]                          # folded BN3
    if use_res:
        y = y + res_ref[0]
    o_ref[0] = y.astype(o_ref.dtype)


# ---------------------------------------------------------------------------
# Wrapper
# ---------------------------------------------------------------------------
def mobile_bottleneck(x, params, *, kernel_size, stride, se, nl, bn_eps=1e-5):
    assert stride in (1, 2) and kernel_size in (3, 5)
    f32 = jnp.float32
    n, cin, h, w = x.shape
    w1 = params["w1"].astype(f32)          # (exp, inp)
    w3 = params["w3"].astype(f32)          # (oup, exp)
    cexp, coup = w1.shape[0], w3.shape[0]
    use_res = (stride == 1 and cin == coup)

    scale1, shift1 = _fold_bn(params["bn1_gamma"], params["bn1_beta"],
                              params["bn1_mean"], params["bn1_var"], bn_eps)
    scale2, shift2 = _fold_bn(params["bn2_gamma"], params["bn2_beta"],
                              params["bn2_mean"], params["bn2_var"], bn_eps)
    scale3, shift3 = _fold_bn(params["bn3_gamma"], params["bn3_beta"],
                              params["bn3_mean"], params["bn3_var"], bn_eps)

    # ---- stage A: 1x1 expand conv + BN1 + act (spatial on lanes, tiled) ----
    hw = h * w
    tile_a, hw_pad = _pick_spatial_tile(hw, max(cin, cexp))
    xf = x.reshape(n, cin, hw).astype(f32)
    if hw_pad != hw:
        xf = jnp.pad(xf, ((0, 0), (0, 0), (0, hw_pad - hw)))
    h1 = pl.pallas_call(
        functools.partial(_pw_conv_bn_act_kernel, nl=nl),
        out_shape=jax.ShapeDtypeStruct((n, cexp, hw_pad), f32),
        grid_spec=pltpu.PrefetchScalarGridSpec(
            num_scalar_prefetch=0,
            grid=(n, hw_pad // tile_a),
            in_specs=[
                pl.BlockSpec((1, cin, tile_a), lambda i, t: (i, 0, t)),
                pl.BlockSpec((cexp, cin), lambda i, t: (0, 0)),
                pl.BlockSpec((cexp, 1), lambda i, t: (0, 0)),
                pl.BlockSpec((cexp, 1), lambda i, t: (0, 0)),
            ],
            out_specs=pl.BlockSpec((1, cexp, tile_a), lambda i, t: (i, 0, t)),
        ),
        compiler_params=pltpu.CompilerParams(
            dimension_semantics=("parallel", "parallel"),
            vmem_limit_bytes=_VMEM_LIMIT_BYTES),
    )(xf, w1, scale1, shift1)
    h1 = h1[:, :, :hw].reshape(n, cexp, h, w)

    # ---- stage B: kxk depthwise conv (computed at stride 1) + BN2 ----
    k = kernel_size
    p = (k - 1) // 2
    hp, wp = h + 2 * p, w + 2 * p
    lpad = hp * wp + (k - 1)
    lout = h * wp
    h1p = jnp.pad(h1, ((0, 0), (0, 0), (p, p), (p, p))).reshape(n, cexp, hp * wp)
    h1p = jnp.pad(h1p, ((0, 0), (0, 0), (0, k - 1)))
    w_dw = params["w_dw"].reshape(cexp, k * k).astype(f32)
    z = pl.pallas_call(
        functools.partial(_dw_conv_bn_kernel, k=k, wp=wp, lout=lout),
        out_shape=jax.ShapeDtypeStruct((n, cexp, lout), f32),
        grid_spec=pltpu.PrefetchScalarGridSpec(
            num_scalar_prefetch=0,
            grid=(n,),
            in_specs=[
                pl.BlockSpec((1, cexp, lpad), lambda i: (i, 0, 0)),
                pl.BlockSpec((cexp, k * k), lambda i: (0, 0)),
                pl.BlockSpec((cexp, 1), lambda i: (0, 0)),
                pl.BlockSpec((cexp, 1), lambda i: (0, 0)),
            ],
            out_specs=pl.BlockSpec((1, cexp, lout), lambda i: (i, 0, 0)),
        ),
        compiler_params=pltpu.CompilerParams(
            dimension_semantics=("parallel",),
            vmem_limit_bytes=_VMEM_LIMIT_BYTES),
    )(h1p, w_dw, scale2, shift2)
    z = z.reshape(n, cexp, h, wp)[:, :, :, :w]
    if stride == 2:
        z = z[:, :, ::2, ::2]        # stride-2 conv == subsampled stride-1 conv
    ho, wo = z.shape[2], z.shape[3]
    hwo = ho * wo

    # ---- stage C: squeeze-excite gate (or ones when se=False) ----
    tile_d, hwo_pad = _pick_spatial_tile(hwo, max(cexp, coup))
    zf = z.reshape(n, cexp, hwo)
    if hwo_pad != hwo:
        zf = jnp.pad(zf, ((0, 0), (0, 0), (0, hwo_pad - hwo)))
    if se:
        w_se1_t = params["w_se1"].astype(f32).T     # (exp, exp//4)
        w_se2 = params["w_se2"].astype(f32)         # (exp, exp//4)
        cr = w_se1_t.shape[1]
        gate = pl.pallas_call(
            functools.partial(_se_gate_kernel, inv_hw=1.0 / hwo),
            out_shape=jax.ShapeDtypeStruct((n, cexp, 1), f32),
            grid_spec=pltpu.PrefetchScalarGridSpec(
                num_scalar_prefetch=0,
                grid=(n,),
                in_specs=[
                    pl.BlockSpec((1, cexp, hwo_pad), lambda i: (i, 0, 0)),
                    pl.BlockSpec((cexp, cr), lambda i: (0, 0)),
                    pl.BlockSpec((cexp, cr), lambda i: (0, 0)),
                ],
                out_specs=pl.BlockSpec((1, cexp, 1), lambda i: (i, 0, 0)),
            ),
            compiler_params=pltpu.CompilerParams(
                dimension_semantics=("parallel",),
                vmem_limit_bytes=_VMEM_LIMIT_BYTES),
        )(zf, w_se1_t, w_se2)
    else:
        gate = jnp.ones((n, cexp, 1), f32)

    # ---- stage D: SE scale + act + 1x1 project conv + BN3 (+ residual) ----
    inputs = [zf, gate, w3, scale3, shift3]
    in_specs = [
        pl.BlockSpec((1, cexp, tile_d), lambda i, t: (i, 0, t)),
        pl.BlockSpec((1, cexp, 1), lambda i, t: (i, 0, 0)),
        pl.BlockSpec((coup, cexp), lambda i, t: (0, 0)),
        pl.BlockSpec((coup, 1), lambda i, t: (0, 0)),
        pl.BlockSpec((coup, 1), lambda i, t: (0, 0)),
    ]
    if use_res:
        rf = x.reshape(n, cin, hw).astype(f32)      # stride==1 -> hw == hwo
        if hwo_pad != hwo:
            rf = jnp.pad(rf, ((0, 0), (0, 0), (0, hwo_pad - hwo)))
        inputs.append(rf)
        in_specs.append(pl.BlockSpec((1, coup, tile_d), lambda i, t: (i, 0, t)))
    out = pl.pallas_call(
        functools.partial(_se_act_pw_conv_bn_kernel, nl=nl, use_res=use_res),
        out_shape=jax.ShapeDtypeStruct((n, coup, hwo_pad), f32),
        grid_spec=pltpu.PrefetchScalarGridSpec(
            num_scalar_prefetch=0,
            grid=(n, hwo_pad // tile_d),
            in_specs=in_specs,
            out_specs=pl.BlockSpec((1, coup, tile_d), lambda i, t: (i, 0, t)),
        ),
        compiler_params=pltpu.CompilerParams(
            dimension_semantics=("parallel", "parallel"),
            vmem_limit_bytes=_VMEM_LIMIT_BYTES),
    )(*inputs)
    out = out[:, :, :hwo].reshape(n, coup, ho, wo)
    return out.astype(x.dtype)


# ---------------------------------------------------------------------------
# Pure-JAX reference (mirrors the PyTorch forward, inference-mode BN)
# ---------------------------------------------------------------------------
def _reference(x, params, *, kernel_size, stride, se, nl, bn_eps=1e-5):
    hi = jax.lax.Precision.HIGHEST

    def act(v):
        if nl == "RE":
            return jnp.maximum(v, 0.0)
        return v * jnp.clip(v + 3.0, 0.0, 6.0) / 6.0

    def bn(v, pre):
        g = params[pre + "_gamma"][None, :, None, None]
        b = params[pre + "_beta"][None, :, None, None]
        m = params[pre + "_mean"][None, :, None, None]
        var = params[pre + "_var"][None, :, None, None]
        return (v - m) / jnp.sqrt(var + bn_eps) * g + b

    h = act(bn(jnp.einsum("oc,nchw->nohw", params["w1"], x, precision=hi), "bn1"))
    k = kernel_size
    p = (k - 1) // 2
    dw = params["w_dw"].reshape(-1, 1, k, k)
    h = jax.lax.conv_general_dilated(
        h, dw, window_strides=(stride, stride), padding=((p, p), (p, p)),
        dimension_numbers=("NCHW", "OIHW", "NCHW"),
        feature_group_count=h.shape[1], precision=hi)
    h = bn(h, "bn2")
    if se:
        y = jnp.mean(h, axis=(2, 3))
        y = jnp.maximum(jnp.einsum("nc,rc->nr", y, params["w_se1"], precision=hi), 0.0)
        y = jnp.einsum("nr,cr->nc", y, params["w_se2"], precision=hi)
        y = jnp.clip(y + 3.0, 0.0, 6.0) / 6.0
        h = h * y[:, :, None, None]
    h = act(h)
    out = bn(jnp.einsum("oc,nchw->nohw", params["w3"], h, precision=hi), "bn3")
    if stride == 1 and x.shape[1] == out.shape[1]:
        out = out + x
    return out


if __name__ == "__main__":
    # Small but representative config: inp=16, oup=16, kernel=3, stride=1, exp=32, se=True, nl='HS'
    # (exercises residual connection, SE module, depthwise conv and Hswish).
    N, INP, H, W = 2, 16, 16, 16
    OUP, EXP, K, STRIDE = 16, 32, 3, 1
    SE, NL = True, "HS"

    keys = jax.random.split(jax.random.PRNGKey(0), 20)
    f32 = jnp.float32
    x = jax.random.normal(keys[0], (N, INP, H, W), dtype=f32)

    def _bn_params(k0, k1, k2, k3, c):
        return (jax.random.uniform(k0, (c,), f32, 0.5, 1.5),    # gamma
                0.1 * jax.random.normal(k1, (c,), f32),         # beta
                0.1 * jax.random.normal(k2, (c,), f32),         # running_mean
                jax.random.uniform(k3, (c,), f32, 0.5, 1.5))    # running_var

    g1, b1, m1, v1 = _bn_params(keys[2], keys[3], keys[4], keys[5], EXP)
    g2, b2, m2, v2 = _bn_params(keys[7], keys[8], keys[9], keys[10], EXP)
    g3, b3, m3, v3 = _bn_params(keys[14], keys[15], keys[16], keys[17], OUP)
    params = {
        "w1": jax.random.normal(keys[1], (EXP, INP), f32) / jnp.sqrt(INP * 1.0),
        "bn1_gamma": g1, "bn1_beta": b1, "bn1_mean": m1, "bn1_var": v1,
        "w_dw": jax.random.normal(keys[6], (EXP, K, K), f32) / K,
        "bn2_gamma": g2, "bn2_beta": b2, "bn2_mean": m2, "bn2_var": v2,
        "w_se1": jax.random.normal(keys[11], (EXP // 4, EXP), f32) / jnp.sqrt(EXP * 1.0),
        "w_se2": jax.random.normal(keys[12], (EXP, EXP // 4), f32) / jnp.sqrt(EXP / 4.0),
        "w3": jax.random.normal(keys[13], (OUP, EXP), f32) / jnp.sqrt(EXP * 1.0),
        "bn3_gamma": g3, "bn3_beta": b3, "bn3_mean": m3, "bn3_var": v3,
    }

    fwd = jax.jit(functools.partial(mobile_bottleneck,
                                    kernel_size=K, stride=STRIDE, se=SE, nl=NL))
    out = jax.block_until_ready(fwd(x, params))

    ref = _reference(x, params, kernel_size=K, stride=STRIDE, se=SE, nl=NL)
    assert out.shape == ref.shape == (N, OUP, H // STRIDE, W // STRIDE), out.shape
    err = float(jnp.max(jnp.abs(out - ref)))
    assert err < 2e-3, f"max abs err {err}"
    print("KERNEL_OK")
</pallas_src>

<mosaic_0001>
module attributes {stable_mosaic.version = 11 : i64} {
  func.func @_pw_conv_bn_act_kernel(%arg0: i32, %arg1: i32, %arg2: memref<1x16x256xf32, #tpu.memory_space<vmem>>, %arg3: memref<32x16xf32, #tpu.memory_space<vmem>>, %arg4: memref<32x1xf32, #tpu.memory_space<vmem>>, %arg5: memref<32x1xf32, #tpu.memory_space<vmem>>, %arg6: memref<1x32x256xf32, #tpu.memory_space<vmem>>) attributes {dimension_semantics = [#tpu.dimension_semantics<parallel>, #tpu.dimension_semantics<parallel>], iteration_bounds = array<i64: 2, 1>, scalar_prefetch = 0 : i64, scratch_operands = 0 : i64, tpu.core_type = #tpu.core_type<tc>, window_params = [{transform_indices = @transform_0, window_bounds = array<i64: 1, 16, 256>}, {pipeline_mode = #tpu.pipeline_mode<synchronous>, transform_indices = @transform_1, window_bounds = array<i64: 32, 16>}, {pipeline_mode = #tpu.pipeline_mode<synchronous>, transform_indices = @transform_2, window_bounds = array<i64: 32, 1>}, {pipeline_mode = #tpu.pipeline_mode<synchronous>, transform_indices = @transform_3, window_bounds = array<i64: 32, 1>}, {transform_indices = @transform_4, window_bounds = array<i64: 1, 32, 256>}]} {
    %c0 = arith.constant 0 : index
    %c0_0 = arith.constant 0 : index
    %0 = vector.load %arg3[%c0, %c0_0] : memref<32x16xf32, #tpu.memory_space<vmem>>, vector<32x16xf32>
    %c0_1 = arith.constant 0 : index
    %c0_2 = arith.constant 0 : index
    %c0_3 = arith.constant 0 : index
    %1 = vector.load %arg2[%c0_1, %c0_2, %c0_3] : memref<1x16x256xf32, #tpu.memory_space<vmem>>, vector<1x16x256xf32>
    %2 = vector.shape_cast %1 : vector<1x16x256xf32> to vector<16x256xf32>
    %cst = arith.constant dense<0.000000e+00> : vector<32x256xf32>
    %3 = tpu.matmul %0, %2, %cst {dimension_numbers = #tpu.dot_dimension_numbers<[1], [0], [0], [1], [0, 0, 1, 1], [], []>} : vector<32x16xf32>, vector<16x256xf32>, vector<32x256xf32> -> vector<32x256xf32>
    %c0_4 = arith.constant 0 : index
    %c0_5 = arith.constant 0 : index
    %4 = vector.load %arg4[%c0_4, %c0_5] : memref<32x1xf32, #tpu.memory_space<vmem>>, vector<32x1xf32>
    %5 = vector.broadcast %4 : vector<32x1xf32> to vector<32x256xf32>
    %6 = arith.mulf %3, %5 : vector<32x256xf32>
    %c0_6 = arith.constant 0 : index
    %c0_7 = arith.constant 0 : index
    %7 = vector.load %arg5[%c0_6, %c0_7] : memref<32x1xf32, #tpu.memory_space<vmem>>, vector<32x1xf32>
    %8 = vector.broadcast %7 : vector<32x1xf32> to vector<32x256xf32>
    %9 = arith.addf %6, %8 : vector<32x256xf32>
    %cst_8 = arith.constant 3.000000e+00 : f32
    %10 = vector.broadcast %cst_8 : f32 to vector<32x256xf32>
    %11 = arith.addf %9, %10 : vector<32x256xf32>
    %cst_9 = arith.constant 0.000000e+00 : f32
    %cst_10 = arith.constant 6.000000e+00 : f32
    %12 = vector.broadcast %cst_9 : f32 to vector<32x256xf32>
    %13 = arith.maximumf %12, %11 : vector<32x256xf32>
    %14 = vector.broadcast %cst_10 : f32 to vector<32x256xf32>
    %15 = arith.minimumf %14, %13 : vector<32x256xf32>
    %cst_11 = arith.constant 0.166666672 : f32
    %16 = vector.broadcast %cst_11 : f32 to vector<32x256xf32>
    %17 = arith.mulf %15, %16 : vector<32x256xf32>
    %18 = arith.mulf %9, %17 : vector<32x256xf32>
    %c0_12 = arith.constant 0 : index
    %c0_13 = arith.constant 0 : index
    %c0_14 = arith.constant 0 : index
    %19 = vector.load %arg6[%c0_12, %c0_13, %c0_14] : memref<1x32x256xf32, #tpu.memory_space<vmem>>, vector<1x32x256xf32>
    %20 = vector.shape_cast %19 : vector<1x32x256xf32> to vector<32x256xf32>
    %21 = vector.shape_cast %18 : vector<32x256xf32> to vector<1x32x256xf32>
    tpu.vector_store %arg6[%c0_12, %c0_13, %c0_14], %21 {strides = array<i32>} : memref<1x32x256xf32, #tpu.memory_space<vmem>>, vector<1x32x256xf32>,
    return
  }
  func.func @transform_0(%arg0: i32, %arg1: i32) -> (i32, i32, i32) {
    %c0_i32 = arith.constant 0 : i32
    %c0_i32_0 = arith.constant 0 : i32
    return %arg0, %c0_i32, %arg1 : i32, i32, i32
  }
  func.func @transform_1(%arg0: i32, %arg1: i32) -> (i32, i32) {
    %c0_i32 = arith.constant 0 : i32
    %c0_i32_0 = arith.constant 0 : i32
    %c0_i32_1 = arith.constant 0 : i32
    return %c0_i32, %c0_i32_0 : i32, i32
  }
  func.func @transform_2(%arg0: i32, %arg1: i32) -> (i32, i32) {
    %c0_i32 = arith.constant 0 : i32
    %c0_i32_0 = arith.constant 0 : i32
    %c0_i32_1 = arith.constant 0 : i32
    return %c0_i32, %c0_i32_0 : i32, i32
  }
  func.func @transform_3(%arg0: i32, %arg1: i32) -> (i32, i32) {
    %c0_i32 = arith.constant 0 : i32
    %c0_i32_0 = arith.constant 0 : i32
    %c0_i32_1 = arith.constant 0 : i32
    return %c0_i32, %c0_i32_0 : i32, i32
  }
  func.func @transform_4(%arg0: i32, %arg1: i32) -> (i32, i32, i32) {
    %c0_i32 = arith.constant 0 : i32
    %c0_i32_0 = arith.constant 0 : i32
    return %arg0, %c0_i32, %arg1 : i32, i32, i32
  }
}

module attributes {stable_mosaic.version = 11 : i64} {
  func.func @_dw_conv_bn_kernel(%arg0: i32, %arg1: memref<1x32x326xf32, #tpu.memory_space<vmem>>, %arg2: memref<32x9xf32, #tpu.memory_space<vmem>>, %arg3: memref<32x1xf32, #tpu.memory_space<vmem>>, %arg4: memref<32x1xf32, #tpu.memory_space<vmem>>, %arg5: memref<1x32x288xf32, #tpu.memory_space<vmem>>) attributes {dimension_semantics = [#tpu.dimension_semantics<parallel>], iteration_bounds = array<i64: 2>, scalar_prefetch = 0 : i64, scratch_operands = 0 : i64, tpu.core_type = #tpu.core_type<tc>, window_params = [{transform_indices = @transform_0, window_bounds = array<i64: 1, 32, 326>}, {pipeline_mode = #tpu.pipeline_mode<synchronous>, transform_indices = @transform_1, window_bounds = array<i64: 32, 9>}, {pipeline_mode = #tpu.pipeline_mode<synchronous>, transform_indices = @transform_2, window_bounds = array<i64: 32, 1>}, {pipeline_mode = #tpu.pipeline_mode<synchronous>, transform_indices = @transform_3, window_bounds = array<i64: 32, 1>}, {transform_indices = @transform_4, window_bounds = array<i64: 1, 32, 288>}]} {
    %c0 = arith.constant 0 : index
    %c0_0 = arith.constant 0 : index
    %c0_1 = arith.constant 0 : index
    %0 = vector.load %arg1[%c0, %c0_0, %c0_1] : memref<1x32x326xf32, #tpu.memory_space<vmem>>, vector<1x32x326xf32>
    %1 = vector.shape_cast %0 : vector<1x32x326xf32> to vector<32x326xf32>
    %cst = arith.constant 0.000000e+00 : f32
    %2 = vector.broadcast %cst : f32 to vector<32x288xf32>
    %c0_2 = arith.constant 0 : index
    %c0_3 = arith.constant 0 : index
    %3 = vector.load %arg2[%c0_2, %c0_3] : memref<32x9xf32, #tpu.memory_space<vmem>>, vector<32x1xf32>
    %4 = vector.extract_strided_slice %1 {offsets = [0, 0], sizes = [32, 288], strides = [1, 1]} : vector<32x326xf32> to vector<32x288xf32>
    %5 = vector.broadcast %3 : vector<32x1xf32> to vector<32x288xf32>
    %6 = arith.mulf %5, %4 : vector<32x288xf32>
    %7 = arith.addf %2, %6 : vector<32x288xf32>
    %c0_4 = arith.constant 0 : index
    %c1 = arith.constant 1 : index
    %8 = vector.load %arg2[%c0_4, %c1] : memref<32x9xf32, #tpu.memory_space<vmem>>, vector<32x1xf32>
    %9 = vector.extract_strided_slice %1 {offsets = [0, 1], sizes = [32, 288], strides = [1, 1]} : vector<32x326xf32> to vector<32x288xf32>
    %10 = vector.broadcast %8 : vector<32x1xf32> to vector<32x288xf32>
    %11 = arith.mulf %10, %9 : vector<32x288xf32>
    %12 = arith.addf %7, %11 : vector<32x288xf32>
    %c0_5 = arith.constant 0 : index
    %c2 = arith.constant 2 : index
    %13 = vector.load %arg2[%c0_5, %c2] : memref<32x9xf32, #tpu.memory_space<vmem>>, vector<32x1xf32>
    %14 = vector.extract_strided_slice %1 {offsets = [0, 2], sizes = [32, 288], strides = [1, 1]} : vector<32x326xf32> to vector<32x288xf32>
    %15 = vector.broadcast %13 : vector<32x1xf32> to vector<32x288xf32>
    %16 = arith.mulf %15, %14 : vector<32x288xf32>
    %17 = arith.addf %12, %16 : vector<32x288xf32>
    %c0_6 = arith.constant 0 : index
    %c3 = arith.constant 3 : index
    %18 = vector.load %arg2[%c0_6, %c3] : memref<32x9xf32, #tpu.memory_space<vmem>>, vector<32x1xf32>
    %19 = vector.extract_strided_slice %1 {offsets = [0, 18], sizes = [32, 288], strides = [1, 1]} : vector<32x326xf32> to vector<32x288xf32>
    %20 = vector.broadcast %18 : vector<32x1xf32> to vector<32x288xf32>
    %21 = arith.mulf %20, %19 : vector<32x288xf32>
    %22 = arith.addf %17, %21 : vector<32x288xf32>
    %c0_7 = arith.constant 0 : index
    %c4 = arith.constant 4 : index
    %23 = vector.load %arg2[%c0_7, %c4] : memref<32x9xf32, #tpu.memory_space<vmem>>, vector<32x1xf32>
    %24 = vector.extract_strided_slice %1 {offsets = [0, 19], sizes = [32, 288], strides = [1, 1]} : vector<32x326xf32> to vector<32x288xf32>
    %25 = vector.broadcast %23 : vector<32x1xf32> to vector<32x288xf32>
    %26 = arith.mulf %25, %24 : vector<32x288xf32>
    %27 = arith.addf %22, %26 : vector<32x288xf32>
    %c0_8 = arith.constant 0 : index
    %c5 = arith.constant 5 : index
    %28 = vector.load %arg2[%c0_8, %c5] : memref<32x9xf32, #tpu.memory_space<vmem>>, vector<32x1xf32>
    %29 = vector.extract_strided_slice %1 {offsets = [0, 20], sizes = [32, 288], strides = [1, 1]} : vector<32x326xf32> to vector<32x288xf32>
    %30 = vector.broadcast %28 : vector<32x1xf32> to vector<32x288xf32>
    %31 = arith.mulf %30, %29 : vector<32x288xf32>
    %32 = arith.addf %27, %31 : vector<32x288xf32>
    %c0_9 = arith.constant 0 : index
    %c6 = arith.constant 6 : index
    %33 = vector.load %arg2[%c0_9, %c6] : memref<32x9xf32, #tpu.memory_space<vmem>>, vector<32x1xf32>
    %34 = vector.extract_strided_slice %1 {offsets = [0, 36], sizes = [32, 288], strides = [1, 1]} : vector<32x326xf32> to vector<32x288xf32>
    %35 = vector.broadcast %33 : vector<32x1xf32> to vector<32x288xf32>
    %36 = arith.mulf %35, %34 : vector<32x288xf32>
    %37 = arith.addf %32, %36 : vector<32x288xf32>
    %c0_10 = arith.constant 0 : index
    %c7 = arith.constant 7 : index
    %38 = vector.load %arg2[%c0_10, %c7] : memref<32x9xf32, #tpu.memory_space<vmem>>, vector<32x1xf32>
    %39 = vector.extract_strided_slice %1 {offsets = [0, 37], sizes = [32, 288], strides = [1, 1]} : vector<32x326xf32> to vector<32x288xf32>
    %40 = vector.broadcast %38 : vector<32x1xf32> to vector<32x288xf32>
    %41 = arith.mulf %40, %39 : vector<32x288xf32>
    %42 = arith.addf %37, %41 : vector<32x288xf32>
    %c0_11 = arith.constant 0 : index
    %c8 = arith.constant 8 : index
    %43 = vector.load %arg2[%c0_11, %c8] : memref<32x9xf32, #tpu.memory_space<vmem>>, vector<32x1xf32>
    %44 = vector.extract_strided_slice %1 {offsets = [0, 38], sizes = [32, 288], strides = [1, 1]} : vector<32x326xf32> to vector<32x288xf32>
    %45 = vector.broadcast %43 : vector<32x1xf32> to vector<32x288xf32>
    %46 = arith.mulf %45, %44 : vector<32x288xf32>
    %47 = arith.addf %42, %46 : vector<32x288xf32>
    %c0_12 = arith.constant 0 : index
    %c0_13 = arith.constant 0 : index
    %48 = vector.load %arg3[%c0_12, %c0_13] : memref<32x1xf32, #tpu.memory_space<vmem>>, vector<32x1xf32>
    %49 = vector.broadcast %48 : vector<32x1xf32> to vector<32x288xf32>
    %50 = arith.mulf %47, %49 : vector<32x288xf32>
    %c0_14 = arith.constant 0 : index
    %c0_15 = arith.constant 0 : index
    %51 = vector.load %arg4[%c0_14, %c0_15] : memref<32x1xf32, #tpu.memory_space<vmem>>, vector<32x1xf32>
    %52 = vector.broadcast %51 : vector<32x1xf32> to vector<32x288xf32>
    %53 = arith.addf %50, %52 : vector<32x288xf32>
    %c0_16 = arith.constant 0 : index
    %c0_17 = arith.constant 0 : index
    %c0_18 = arith.constant 0 : index
    %54 = vector.load %arg5[%c0_16, %c0_17, %c0_18] : memref<1x32x288xf32, #tpu.memory_space<vmem>>, vector<1x32x288xf32>
    %55 = vector.shape_cast %54 : vector<1x32x288xf32> to vector<32x288xf32>
    %56 = vector.shape_cast %53 : vector<32x288xf32> to vector<1x32x288xf32>
    tpu.vector_store %arg5[%c0_16, %c0_17, %c0_18], %56 {strides = array<i32>} : memref<1x32x288xf32, #tpu.memory_space<vmem>>, vector<1x32x288xf32>,
    return
  }
  func.func @transform_0(%arg0: i32) -> (i32, i32, i32) {
    %c0_i32 = arith.constant 0 : i32
    %c0_i32_0 = arith.constant 0 : i32
    %c0_i32_1 = arith.constant 0 : i32
    return %arg0, %c0_i32, %c0_i32_0 : i32, i32, i32
  }
  func.func @transform_1(%arg0: i32) -> (i32, i32) {
    %c0_i32 = arith.constant 0 : i32
    %c0_i32_0 = arith.constant 0 : i32
    %c0_i32_1 = arith.constant 0 : i32
    return %c0_i32, %c0_i32_0 : i32, i32
  }
  func.func @transform_2(%arg0: i32) -> (i32, i32) {
    %c0_i32 = arith.constant 0 : i32
    %c0_i32_0 = arith.constant 0 : i32
    %c0_i32_1 = arith.constant 0 : i32
    return %c0_i32, %c0_i32_0 : i32, i32
  }
  func.func @transform_3(%arg0: i32) -> (i32, i32) {
    %c0_i32 = arith.constant 0 : i32
    %c0_i32_0 = arith.constant 0 : i32
    %c0_i32_1 = arith.constant 0 : i32
    return %c0_i32, %c0_i32_0 : i32, i32
  }
  func.func @transform_4(%arg0: i32) -> (i32, i32, i32) {
    %c0_i32 = arith.constant 0 : i32
    %c0_i32_0 = arith.constant 0 : i32
    %c0_i32_1 = arith.constant 0 : i32
    return %arg0, %c0_i32, %c0_i32_0 : i32, i32, i32
  }
}

module attributes {stable_mosaic.version = 11 : i64} {
  func.func @_se_gate_kernel(%arg0: i32, %arg1: memref<1x32x256xf32, #tpu.memory_space<vmem>>, %arg2: memref<32x8xf32, #tpu.memory_space<vmem>>, %arg3: memref<32x8xf32, #tpu.memory_space<vmem>>, %arg4: memref<1x32x1xf32, #tpu.memory_space<vmem>>) attributes {dimension_semantics = [#tpu.dimension_semantics<parallel>], iteration_bounds = array<i64: 2>, scalar_prefetch = 0 : i64, scratch_operands = 0 : i64, tpu.core_type = #tpu.core_type<tc>, window_params = [{transform_indices = @transform_0, window_bounds = array<i64: 1, 32, 256>}, {pipeline_mode = #tpu.pipeline_mode<synchronous>, transform_indices = @transform_1, window_bounds = array<i64: 32, 8>}, {pipeline_mode = #tpu.pipeline_mode<synchronous>, transform_indices = @transform_2, window_bounds = array<i64: 32, 8>}, {transform_indices = @transform_3, window_bounds = array<i64: 1, 32, 1>}]} {
    %c0 = arith.constant 0 : index
    %c0_0 = arith.constant 0 : index
    %c0_1 = arith.constant 0 : index
    %0 = vector.load %arg1[%c0, %c0_0, %c0_1] : memref<1x32x256xf32, #tpu.memory_space<vmem>>, vector<1x32x256xf32>
    %1 = vector.shape_cast %0 : vector<1x32x256xf32> to vector<32x256xf32>
    %cst = arith.constant dense<0.000000e+00> : vector<32xf32>
    %2 = vector.multi_reduction <add>, %1, %cst [1] : vector<32x256xf32> to vector<32xf32>
    %3 = vector.shape_cast %2 : vector<32xf32> to vector<32x1xf32>
    %cst_2 = arith.constant 3.906250e-03 : f32
    %4 = vector.broadcast %cst_2 : f32 to vector<32x1xf32>
    %5 = arith.mulf %3, %4 : vector<32x1xf32>
    %c0_3 = arith.constant 0 : index
    %c0_4 = arith.constant 0 : index
    %6 = vector.load %arg2[%c0_3, %c0_4] : memref<32x8xf32, #tpu.memory_space<vmem>>, vector<32x8xf32>
    %7 = vector.broadcast %5 : vector<32x1xf32> to vector<32x8xf32>
    %8 = arith.mulf %6, %7 : vector<32x8xf32>
    %cst_5 = arith.constant dense<0.000000e+00> : vector<8xf32>
    %9 = vector.multi_reduction <add>, %8, %cst_5 [0] : vector<32x8xf32> to vector<8xf32>
    %10 = vector.shape_cast %9 : vector<8xf32> to vector<1x8xf32>
    %cst_6 = arith.constant 0.000000e+00 : f32
    %11 = vector.broadcast %cst_6 : f32 to vector<1x8xf32>
    %12 = arith.maximumf %10, %11 : vector<1x8xf32>
    %c0_7 = arith.constant 0 : index
    %c0_8 = arith.constant 0 : index
    %13 = vector.load %arg3[%c0_7, %c0_8] : memref<32x8xf32, #tpu.memory_space<vmem>>, vector<32x8xf32>
    %14 = vector.broadcast %12 : vector<1x8xf32> to vector<32x8xf32>
    %15 = arith.mulf %13, %14 : vector<32x8xf32>
    %cst_9 = arith.constant dense<0.000000e+00> : vector<32xf32>
    %16 = vector.multi_reduction <add>, %15, %cst_9 [1] : vector<32x8xf32> to vector<32xf32>
    %17 = vector.shape_cast %16 : vector<32xf32> to vector<32x1xf32>
    %cst_10 = arith.constant 3.000000e+00 : f32
    %18 = vector.broadcast %cst_10 : f32 to vector<32x1xf32>
    %19 = arith.addf %17, %18 : vector<32x1xf32>
    %cst_11 = arith.constant 0.000000e+00 : f32
    %cst_12 = arith.constant 6.000000e+00 : f32
    %20 = vector.broadcast %cst_11 : f32 to vector<32x1xf32>
    %21 = arith.maximumf %20, %19 : vector<32x1xf32>
    %22 = vector.broadcast %cst_12 : f32 to vector<32x1xf32>
    %23 = arith.minimumf %22, %21 : vector<32x1xf32>
    %cst_13 = arith.constant 0.166666672 : f32
    %24 = vector.broadcast %cst_13 : f32 to vector<32x1xf32>
    %25 = arith.mulf %23, %24 : vector<32x1xf32>
    %c0_14 = arith.constant 0 : index
    %c0_15 = arith.constant 0 : index
    %c0_16 = arith.constant 0 : index
    %26 = vector.load %arg4[%c0_14, %c0_15, %c0_16] : memref<1x32x1xf32, #tpu.memory_space<vmem>>, vector<1x32x1xf32>
    %27 = vector.shape_cast %26 : vector<1x32x1xf32> to vector<32x1xf32>
    %28 = vector.shape_cast %25 : vector<32x1xf32> to vector<1x32x1xf32>
    tpu.vector_store %arg4[%c0_14, %c0_15, %c0_16], %28 {strides = array<i32>} : memref<1x32x1xf32, #tpu.memory_space<vmem>>, vector<1x32x1xf32>,
    return
  }
  func.func @transform_0(%arg0: i32) -> (i32, i32, i32) {
    %c0_i32 = arith.constant 0 : i32
    %c0_i32_0 = arith.constant 0 : i32
    %c0_i32_1 = arith.constant 0 : i32
    return %arg0, %c0_i32, %c0_i32_0 : i32, i32, i32
  }
  func.func @transform_1(%arg0: i32) -> (i32, i32) {
    %c0_i32 = arith.constant 0 : i32
    %c0_i32_0 = arith.constant 0 : i32
    %c0_i32_1 = arith.constant 0 : i32
    return %c0_i32, %c0_i32_0 : i32, i32
  }
  func.func @transform_2(%arg0: i32) -> (i32, i32) {
    %c0_i32 = arith.constant 0 : i32
    %c0_i32_0 = arith.constant 0 : i32
    %c0_i32_1 = arith.constant 0 : i32
    return %c0_i32, %c0_i32_0 : i32, i32
  }
  func.func @transform_3(%arg0: i32) -> (i32, i32, i32) {
    %c0_i32 = arith.constant 0 : i32
    %c0_i32_0 = arith.constant 0 : i32
    %c0_i32_1 = arith.constant 0 : i32
    return %arg0, %c0_i32, %c0_i32_0 : i32, i32, i32
  }
}

module attributes {stable_mosaic.version = 11 : i64} {
  func.func @_se_act_pw_conv_bn_kernel(%arg0: i32, %arg1: i32, %arg2: memref<1x32x256xf32, #tpu.memory_space<vmem>>, %arg3: memref<1x32x1xf32, #tpu.memory_space<vmem>>, %arg4: memref<16x32xf32, #tpu.memory_space<vmem>>, %arg5: memref<16x1xf32, #tpu.memory_space<vmem>>, %arg6: memref<16x1xf32, #tpu.memory_space<vmem>>, %arg7: memref<1x16x256xf32, #tpu.memory_space<vmem>>, %arg8: memref<1x16x256xf32, #tpu.memory_space<vmem>>) attributes {dimension_semantics = [#tpu.dimension_semantics<parallel>, #tpu.dimension_semantics<parallel>], iteration_bounds = array<i64: 2, 1>, scalar_prefetch = 0 : i64, scratch_operands = 0 : i64, tpu.core_type = #tpu.core_type<tc>, window_params = [{transform_indices = @transform_0, window_bounds = array<i64: 1, 32, 256>}, {transform_indices = @transform_1, window_bounds = array<i64: 1, 32, 1>}, {pipeline_mode = #tpu.pipeline_mode<synchronous>, transform_indices = @transform_2, window_bounds = array<i64: 16, 32>}, {pipeline_mode = #tpu.pipeline_mode<synchronous>, transform_indices = @transform_3, window_bounds = array<i64: 16, 1>}, {pipeline_mode = #tpu.pipeline_mode<synchronous>, transform_indices = @transform_4, window_bounds = array<i64: 16, 1>}, {transform_indices = @transform_5, window_bounds = array<i64: 1, 16, 256>}, {transform_indices = @transform_6, window_bounds = array<i64: 1, 16, 256>}]} {
    %c0 = arith.constant 0 : index
    %c0_0 = arith.constant 0 : index
    %c0_1 = arith.constant 0 : index
    %0 = vector.load %arg2[%c0, %c0_0, %c0_1] : memref<1x32x256xf32, #tpu.memory_space<vmem>>, vector<1x32x256xf32>
    %1 = vector.shape_cast %0 : vector<1x32x256xf32> to vector<32x256xf32>
    %c0_2 = arith.constant 0 : index
    %c0_3 = arith.constant 0 : index
    %c0_4 = arith.constant 0 : index
    %2 = vector.load %arg3[%c0_2, %c0_3, %c0_4] : memref<1x32x1xf32, #tpu.memory_space<vmem>>, vector<1x32x1xf32>
    %3 = vector.shape_cast %2 : vector<1x32x1xf32> to vector<32x1xf32>
    %4 = vector.broadcast %3 : vector<32x1xf32> to vector<32x256xf32>
    %5 = arith.mulf %1, %4 : vector<32x256xf32>
    %cst = arith.constant 3.000000e+00 : f32
    %6 = vector.broadcast %cst : f32 to vector<32x256xf32>
    %7 = arith.addf %5, %6 : vector<32x256xf32>
    %cst_5 = arith.constant 0.000000e+00 : f32
    %cst_6 = arith.constant 6.000000e+00 : f32
    %8 = vector.broadcast %cst_5 : f32 to vector<32x256xf32>
    %9 = arith.maximumf %8, %7 : vector<32x256xf32>
    %10 = vector.broadcast %cst_6 : f32 to vector<32x256xf32>
    %11 = arith.minimumf %10, %9 : vector<32x256xf32>
    %cst_7 = arith.constant 0.166666672 : f32
    %12 = vector.broadcast %cst_7 : f32 to vector<32x256xf32>
    %13 = arith.mulf %11, %12 : vector<32x256xf32>
    %14 = arith.mulf %5, %13 : vector<32x256xf32>
    %c0_8 = arith.constant 0 : index
    %c0_9 = arith.constant 0 : index
    %15 = vector.load %arg4[%c0_8, %c0_9] : memref<16x32xf32, #tpu.memory_space<vmem>>, vector<16x32xf32>
    %cst_10 = arith.constant dense<0.000000e+00> : vector<16x256xf32>
    %16 = tpu.matmul %15, %14, %cst_10 {dimension_numbers = #tpu.dot_dimension_numbers<[1], [0], [0], [1], [0, 0, 1, 1], [], []>} : vector<16x32xf32>, vector<32x256xf32>, vector<16x256xf32> -> vector<16x256xf32>
    %c0_11 = arith.constant 0 : index
    %c0_12 = arith.constant 0 : index
    %17 = vector.load %arg5[%c0_11, %c0_12] : memref<16x1xf32, #tpu.memory_space<vmem>>, vector<16x1xf32>
    %18 = vector.broadcast %17 : vector<16x1xf32> to vector<16x256xf32>
    %19 = arith.mulf %16, %18 : vector<16x256xf32>
    %c0_13 = arith.constant 0 : index
    %c0_14 = arith.constant 0 : index
    %20 = vector.load %arg6[%c0_13, %c0_14] : memref<16x1xf32, #tpu.memory_space<vmem>>, vector<16x1xf32>
    %21 = vector.broadcast %20 : vector<16x1xf32> to vector<16x256xf32>
    %22 = arith.addf %19, %21 : vector<16x256xf32>
    %c0_15 = arith.constant 0 : index
    %c0_16 = arith.constant 0 : index
    %c0_17 = arith.constant 0 : index
    %23 = vector.load %arg7[%c0_15, %c0_16, %c0_17] : memref<1x16x256xf32, #tpu.memory_space<vmem>>, vector<1x16x256xf32>
    %24 = vector.shape_cast %23 : vector<1x16x256xf32> to vector<16x256xf32>
    %25 = arith.addf %22, %24 : vector<16x256xf32>
    %c0_18 = arith.constant 0 : index
    %c0_19 = arith.constant 0 : index
    %c0_20 = arith.constant 0 : index
    %26 = vector.load %arg8[%c0_18, %c0_19, %c0_20] : memref<1x16x256xf32, #tpu.memory_space<vmem>>, vector<1x16x256xf32>
    %27 = vector.shape_cast %26 : vector<1x16x256xf32> to vector<16x256xf32>
    %28 = vector.shape_cast %25 : vector<16x256xf32> to vector<1x16x256xf32>
    tpu.vector_store %arg8[%c0_18, %c0_19, %c0_20], %28 {strides = array<i32>} : memref<1x16x256xf32, #tpu.memory_space<vmem>>, vector<1x16x256xf32>,
    return
  }
  func.func @transform_0(%arg0: i32, %arg1: i32) -> (i32, i32, i32) {
    %c0_i32 = arith.constant 0 : i32
    %c0_i32_0 = arith.constant 0 : i32
    return %arg0, %c0_i32, %arg1 : i32, i32, i32
  }
  func.func @transform_1(%arg0: i32, %arg1: i32) -> (i32, i32, i32) {
    %c0_i32 = arith.constant 0 : i32
    %c0_i32_0 = arith.constant 0 : i32
    %c0_i32_1 = arith.constant 0 : i32
    return %arg0, %c0_i32, %c0_i32_0 : i32, i32, i32
  }
  func.func @transform_2(%arg0: i32, %arg1: i32) -> (i32, i32) {
    %c0_i32 = arith.constant 0 : i32
    %c0_i32_0 = arith.constant 0 : i32
    %c0_i32_1 = arith.constant 0 : i32
    return %c0_i32, %c0_i32_0 : i32, i32
  }
  func.func @transform_3(%arg0: i32, %arg1: i32) -> (i32, i32) {
    %c0_i32 = arith.constant 0 : i32
    %c0_i32_0 = arith.constant 0 : i32
    %c0_i32_1 = arith.constant 0 : i32
    return %c0_i32, %c0_i32_0 : i32, i32
  }
  func.func @transform_4(%arg0: i32, %arg1: i32) -> (i32, i32) {
    %c0_i32 = arith.constant 0 : i32
    %c0_i32_0 = arith.constant 0 : i32
    %c0_i32_1 = arith.constant 0 : i32
    return %c0_i32, %c0_i32_0 : i32, i32
  }
  func.func @transform_5(%arg0: i32, %arg1: i32) -> (i32, i32, i32) {
    %c0_i32 = arith.constant 0 : i32
    %c0_i32_0 = arith.constant 0 : i32
    return %arg0, %c0_i32, %arg1 : i32, i32, i32
  }
  func.func @transform_6(%arg0: i32, %arg1: i32) -> (i32, i32, i32) {
    %c0_i32 = arith.constant 0 : i32
    %c0_i32_0 = arith.constant 0 : i32
    return %arg0, %c0_i32, %arg1 : i32, i32, i32
  }
}

</mosaic_0001>

<llo_original>
// kernel: mobile_bottleneck.4
$region0: #{mobile_bottleneck.4}
  #allocation0 [shape = 'u32[]', space=smem, size = 0x4, offset = 0x4, fixed_abs, tag = 'smem constant byte address 0x4 - core index']
  #allocation1 [shape = 'u32[144,128]{1,0:T(1,128)}', space=vmem, size = 0x12000, scoped, tag = 'internal scratch']
  %s0 = inlined_call_operand.vmem [shape: f32[2,16,256], index: 0, kind: input, shape index: {}]
  %s1 = inlined_call_operand.vmem [shape: f32[32,16], index: 1, kind: input, shape index: {}]
  %s2 = inlined_call_operand.vmem [shape: f32[32,1], index: 2, kind: input, shape index: {}]
  %s3 = inlined_call_operand.vmem [shape: f32[32,1], index: 3, kind: input, shape index: {}]
  %s4 = inlined_call_operand.vmem [shape: f32[2,32,256], index: 4, kind: output, shape index: {}]
  %s5 = sld [smem:[#allocation0]]
  $region49: #{mobile_bottleneck.4} parent=0
    _
  %s7 = ssub.s32 1, %s5
  %s8 = scalar_select 0, %s7, %s5
  loop: start=0, step=1, limit=4
  $region2: #{mobile_bottleneck.4} parent=0 // loop_pre_header
    _
  $region3: #{mobile_bottleneck.4} parent=0 // loop_header
    %s10 = sphi 0, %s14
    %p11 = scmp.ge.s32.totalorder %s10, 4
    %s17 = sphi 0, %s29
    %s18 = sphi 0, %s25
    %s19 = sphi 0, %s17
    %s20 = sphi 0, %s18
    %s21 = sphi 0, %s19
    %s22 = sphi 0, %s20
    %s34 = sphi 0, %s36
    %s37 = sphi 0, %s34
    %s38 = sphi 0, %s37
    %s54 = sphi 0, %s38
    %s58 = sphi 0, %s58
    %s60 = sphi 0, %s58
    %s61 = sphi 0, %s60
    %s75 = sphi 0, %s61
    %s79 = sphi 0, %s79
    %s81 = sphi 0, %s79
    %s82 = sphi 0, %s81
    %s96 = sphi 0, %s82
    %s100 = sphi 0, %s100
    %s102 = sphi 0, %s100
    %s103 = sphi 0, %s102
    %s117 = sphi 0, %s103
    %s125 = sphi 0, %s127
    %s128 = sphi 0, %s125
    %s129 = sphi 0, %s128
    %s145 = sphi 0, %s129
  $region4: #{mobile_bottleneck.4} parent=0 // loop_header_branch
    %13 = sbr.rel (%p11) target = $region8
  $region5: #{mobile_bottleneck.4} parent=0 // loop_body
    %s15 = ssub.s32 %s10, 1
    %s16 = ssub.s32 %s10, 2
    %s23 = sadd.s32 1, %s18
    %p24 = scmp.ge.s32.totalorder %s23, 1
    %s25 = scalar_select %p24, 0, %s23
    %s26 = sadd.s32 1, %s17
    %s27 = scalar_select %p24, %s26, %s17
    %p28 = scmp.ge.s32.totalorder %s27, 2
    %s29 = scalar_select %p28, 0, %s27
    %s30 = ssub.s32 %s17, %s29
    %s31 = ssub.s32 %s18, %s25
    %s32 = sor.u32 %s30, %s31
    %p33 = scmp.eq.s32.totalorder %s32, 0
    %s35 = sadd.s32 %s34, 1
    %s36 = scalar_select %p33, %s34, %s35
    %p39 = pneg %p33
    %p40 = scmp.eq.s32.totalorder %s10, 1
    %p41 = por %p39, %p40
    %p42 = scmp.ne.s32.totalorder %s34, %s37
    %p43 = scmp.eq.s32.totalorder %s10, 0
    %p44 = por %p42, %p43
    %p45 = scmp.ne.s32.totalorder %s34, %s37
    %p46 = scmp.eq.s32.totalorder %s15, 1
    %p47 = por %p45, %p46
    %p48 = scmp.ne.s32.totalorder %s37, %s38
    %p49 = scmp.eq.s32.totalorder %s15, 0
    %p50 = por %p48, %p49
    %p51 = scmp.ne.s32.totalorder %s37, %s38
    %p52 = scmp.eq.s32.totalorder %s16, 1
    %p53 = por %p51, %p52
    %p55 = scmp.ne.s32.totalorder %s38, %s54
    %p56 = scmp.eq.s32.totalorder %s16, 0
    %p57 = por %p55, %p56
    %s59 = sadd.s32 %s58, 1
    %p62 = scmp.eq.s32.totalorder %s10, 1
    %p63 = scmp.ne.s32.totalorder %s58, %s60
    %p64 = scmp.eq.s32.totalorder %s10, 0
    %p65 = por %p63, %p64
    %p66 = scmp.ne.s32.totalorder %s58, %s60
    %p67 = scmp.eq.s32.totalorder %s15, 1
    %p68 = por %p66, %p67
    %p69 = scmp.ne.s32.totalorder %s60, %s61
    %p70 = scmp.eq.s32.totalorder %s15, 0
    %p71 = por %p69, %p70
    %p72 = scmp.ne.s32.totalorder %s60, %s61
    %p73 = scmp.eq.s32.totalorder %s16, 1
    %p74 = por %p72, %p73
    %p76 = scmp.ne.s32.totalorder %s61, %s75
    %p77 = scmp.eq.s32.totalorder %s16, 0
    %p78 = por %p76, %p77
    %s80 = sadd.s32 %s79, 1
    %p83 = scmp.eq.s32.totalorder %s10, 1
    %p84 = scmp.ne.s32.totalorder %s79, %s81
    %p85 = scmp.eq.s32.totalorder %s10, 0
    %p86 = por %p84, %p85
    %p87 = scmp.ne.s32.totalorder %s79, %s81
    %p88 = scmp.eq.s32.totalorder %s15, 1
    %p89 = por %p87, %p88
    %p90 = scmp.ne.s32.totalorder %s81, %s82
    %p91 = scmp.eq.s32.totalorder %s15, 0
    %p92 = por %p90, %p91
    %p93 = scmp.ne.s32.totalorder %s81, %s82
    %p94 = scmp.eq.s32.totalorder %s16, 1
    %p95 = por %p93, %p94
    %p97 = scmp.ne.s32.totalorder %s82, %s96
    %p98 = scmp.eq.s32.totalorder %s16, 0
    %p99 = por %p97, %p98
    %s101 = sadd.s32 %s100, 1
    %p104 = scmp.eq.s32.totalorder %s10, 1
    %p105 = scmp.ne.s32.totalorder %s100, %s102
    %p106 = scmp.eq.s32.totalorder %s10, 0
    %p107 = por %p105, %p106
    %p108 = scmp.ne.s32.totalorder %s100, %s102
    %p109 = scmp.eq.s32.totalorder %s15, 1
    %p110 = por %p108, %p109
    %p111 = scmp.ne.s32.totalorder %s102, %s103
    %p112 = scmp.eq.s32.totalorder %s15, 0
    %p113 = por %p111, %p112
    %p114 = scmp.ne.s32.totalorder %s102, %s103
    %p115 = scmp.eq.s32.totalorder %s16, 1
    %p116 = por %p114, %p115
    %p118 = scmp.ne.s32.totalorder %s103, %s117
    %p119 = scmp.eq.s32.totalorder %s16, 0
    %p120 = por %p118, %p119
    %s121 = ssub.s32 %s17, %s29
    %s122 = ssub.s32 %s18, %s25
    %s123 = sor.u32 %s121, %s122
    %p124 = scmp.eq.s32.totalorder %s123, 0
    %s126 = sadd.s32 %s125, 1
    %s127 = scalar_select %p124, %s125, %s126
    %p130 = pneg %p124
    %p131 = scmp.eq.s32.totalorder %s10, 1
    %p132 = por %p130, %p131
    %p133 = scmp.ne.s32.totalorder %s125, %s128
    %p134 = scmp.eq.s32.totalorder %s10, 0
    %p135 = por %p133, %p134
    %p136 = scmp.ne.s32.totalorder %s125, %s128
    %p137 = scmp.eq.s32.totalorder %s15, 1
    %p138 = por %p136, %p137
    %p139 = scmp.ne.s32.totalorder %s128, %s129
    %p140 = scmp.eq.s32.totalorder %s15, 0
    %p141 = por %p139, %p140
    %p142 = scmp.ne.s32.totalorder %s128, %s129
    %p143 = scmp.eq.s32.totalorder %s16, 1
    %p144 = por %p142, %p143
    %p146 = scmp.ne.s32.totalorder %s129, %s145
    %p147 = scmp.eq.s32.totalorder %s16, 0
    %p148 = por %p146, %p147
    %p149 = scmp.le.s32.totalorder 1, %s10
    %p150 = scmp.lt.s32.totalorder %s10, 3
    %p151 = pnand %p149, %p150
    %p152 = pneg %p151
    // Predicated region
    $region9: #{mobile_bottleneck.4} parent=5 // pred_check
      _
    $region10: #{mobile_bottleneck.4} parent=5 // pred_check_branch
      %154 = sbr.rel (%p151) target = $region12
    $region11: #{mobile_bottleneck.4} parent=5 // pred_region
      %s155 = ssub.s32 %s10, 1
      // Predicated region
      $region13: #{mobile_bottleneck.4} parent=11 // pred_check
        %p156 = pneg %p71
      $region14: #{mobile_bottleneck.4} parent=11 // pred_check_branch
        %158 = sbr.rel (%p156) target = $region16
      $region15: #{mobile_bottleneck.4} parent=11 // pred_region
        _
      $region16: #{mobile_bottleneck.4} parent=11 // pred_fallthru
        _
      // Predicated region
      $region17: #{mobile_bottleneck.4} parent=11 // pred_check
        %p159 = pneg %p92
      $region18: #{mobile_bottleneck.4} parent=11 // pred_check_branch
        %161 = sbr.rel (%p159) target = $region20
      $region19: #{mobile_bottleneck.4} parent=11 // pred_region
        _
      $region20: #{mobile_bottleneck.4} parent=11 // pred_fallthru
        _
      // Predicated region
      $region21: #{mobile_bottleneck.4} parent=11 // pred_check
        %p162 = pneg %p113
      $region22: #{mobile_bottleneck.4} parent=11 // pred_check_branch
        %164 = sbr.rel (%p162) target = $region24
      $region23: #{mobile_bottleneck.4} parent=11 // pred_region
        _
      $region24: #{mobile_bottleneck.4} parent=11 // pred_fallthru
        _
    $region12: #{mobile_bottleneck.4} parent=5 // pred_fallthru
      _
    %p165 = scmp.lt.s32.totalorder %s10, 2
    // Predicated region
    $region25: #{mobile_bottleneck.4} parent=5 // pred_check
      %p166 = pneg %p165
    $region26: #{mobile_bottleneck.4} parent=5 // pred_check_branch
      %168 = sbr.rel (%p166) target = $region28
    $region27: #{mobile_bottleneck.4} parent=5 // pred_region
      // Predicated region
      $region29: #{mobile_bottleneck.4} parent=27 // pred_check
        %p169 = pneg %p44
      $region30: #{mobile_bottleneck.4} parent=27 // pred_check_branch
        %171 = sbr.rel (%p169) target = $region32
      $region31: #{mobile_bottleneck.4} parent=27 // pred_region
        %s172 = smul.u32 2, %s18
        %p173 = scmp.lt.s32.totalorder %s17, 1
        %s174 = scalar_select %p173, %s17, 1
        %p175 = scmp.lt.s32.totalorder %s172, 1
        %s176 = scalar_select %p175, %s172, 1
        %s177 = smul.addr %s174, 4
        %s178 = sadd.s32 %s176, %s177
        %s179 = smul.addr %s178, 8
        %s180 = scalar_lea.vmem %s0, %s179
        %s181 = smul.u32 2, %s18
      $region32: #{mobile_bottleneck.4} parent=27 // pred_fallthru
        _
    $region28: #{mobile_bottleneck.4} parent=5 // pred_fallthru
      _
    %p182 = scmp.le.s32.totalorder 1, %s10
    %p183 = scmp.lt.s32.totalorder %s10, 3
    %p184 = pnand %p182, %p183
    %p185 = pneg %p184
    // Predicated region
    $region33: #{mobile_bottleneck.4} parent=5 // pred_check
      _
    $region34: #{mobile_bottleneck.4} parent=5 // pred_check_branch
      %187 = sbr.rel (%p184) target = $region36
    $region35: #{mobile_bottleneck.4} parent=5 // pred_region
      %s188 = ssub.s32 %s10, 1
      %s189 = smul.u32 2, %s20
      %p190 = scmp.lt.s32.totalorder %s19, 1
      %s191 = scalar_select %p190, %s19, 1
      %p192 = scmp.lt.s32.totalorder %s189, 1
      %s193 = scalar_select %p192, %s189, 1
      %s194 = smul.addr %s191, 4
      %s195 = sadd.s32 %s193, %s194
      %s196 = smul.addr %s195, 8
      %s197 = scalar_lea.vmem %s0, %s196
      %p198 = pneg %p50
      %p199 = pneg %p47
      %p200 = pneg %p71
      %p201 = pneg %p68
      %p202 = pneg %p92
      %p203 = pneg %p89
      %p204 = pneg %p113
      %p205 = pneg %p110
      %p206 = pneg %p141
      %p207 = pneg %p138
      %s208 = smul.u32 2, %s20
      %p209 = scmp.lt.s32.totalorder %s19, 1
      %s210 = scalar_select %p209, %s19, 1
      %p211 = scmp.lt.s32.totalorder %s208, 1
      %s212 = scalar_select %p211, %s208, 1
      %s213 = smul.addr %s210, 8
      %s214 = sadd.s32 %s212, %s213
      %s215 = smul.addr %s214, 8
      %s216 = scalar_lea.vmem %s4, %s215
      %s217 = smul.u32 2, %s20
      %p218 = scmp.lt.s32.totalorder %s19, 1
      %s219 = scalar_select %p218, %s19, 1
      %p220 = scmp.lt.s32.totalorder %s217, 1
      %s221 = scalar_select %p220, %s217, 1
      %s222 = smul.addr %s219, 4
      %s223 = sadd.s32 %s221, %s222
      %s224 = smul.addr %s223, 8
      %s225 = scalar_lea.vmem %s0, %s224
      %s226 = smul.u32 2, %s20
      %s227 = smul.u32 2, %s20
      %p228 = scmp.lt.s32.totalorder %s19, 1
      %s229 = scalar_select %p228, %s19, 1
      %p230 = scmp.lt.s32.totalorder %s227, 1
      %s231 = scalar_select %p230, %s227, 1
      %s232 = smul.addr %s229, 8
      %s233 = sadd.s32 %s231, %s232
      %s234 = smul.addr %s233, 8
      %s235 = scalar_lea.vmem %s4, %s234
      %s236 = smul.u32 2, %s20
      %v237 = vld [vmem:[%s1] sm:$0xff]
      %v238 = vld [vmem:[%s1 + $0x8] sm:$0xff]
      %v239 = vld [vmem:[%s1 + $0x10] sm:$0xff]
      %v240 = vld [vmem:[%s1 + $0x18] sm:$0xff]
      %v241 = vld [vmem:[%s225] sm:$0xff]
      %v242 = vld [vmem:[%s225 + $0x8] sm:$0xff]
      %v243 = vld [vmem:[%s225 + $0x10] sm:$0xff]
      %v244 = vld [vmem:[%s225 + $0x18] sm:$0xff]
      %vm245 = vcmask 130048
      %v247 = vsel %vm245, %v237, 0
      %v250 = vsel %vm245, %v238, 0
      %v253 = vsel %vm245, %v239, 0
      %v256 = vsel %vm245, %v240, 0
      %258 = vmatprep.subr.mxu0 %v242
      %259 = vmatpush1.msra.mxu0 %v241
      %260 = vmatprep.subr.mxu0 %v244
      %261 = vmatpush1.msra.mxu0 %v243
      %262 = vmatprep.subr.mxu0 0.0
      %263 = vmatpush1.msra.mxu0 0.0
      %264 = vmatprep.subr.mxu0 0.0
      %265 = vmatpush1.msra.mxu0 0.0
      %266 = vmatprep.subr.mxu0 0.0
      %267 = vmatpush1.msra.mxu0 0.0
      %268 = vmatprep.subr.mxu0 0.0
      %269 = vmatpush1.msra.mxu0 0.0
      %270 = vmatprep.subr.mxu0 0.0
      %271 = vmatpush1.msra.mxu0 0.0
      %272 = vmatprep.subr.mxu0 0.0
      %273 = vmatpush1.msra.mxu0 0.0
      %274 = vmatprep.subr.mxu0 0.0
      %275 = vmatpush1.msra.mxu0 0.0
      %276 = vmatprep.subr.mxu0 0.0
      %277 = vmatpush1.msra.mxu0 0.0
      %278 = vmatprep.subr.mxu0 0.0
      %279 = vmatpush1.msra.mxu0 0.0
      %280 = vmatprep.subr.mxu0 0.0
      %281 = vmatpush1.msra.mxu0 0.0
      %282 = vmatprep.subr.mxu0 0.0
      %283 = vmatpush1.msra.mxu0 0.0
      %284 = vmatprep.subr.mxu0 0.0
      %285 = vmatpush1.msra.mxu0 0.0
      %286 = vmatprep.subr.mxu0 0.0
      %287 = vmatpush1.msra.mxu0 0.0
      %288 = vmatprep.subr.mxu0 0.0
      %289 = vmatpush1.msra.mxu0 0.0
      %290 = vmatprep.subr.mxu0 0.0
      %291 = vmatpush1.msra.mxu0 0.0
      %292 = vmatprep.subr.mxu0 0.0
      %293 = vmatpush1.msra.mxu0 0.0
      %294 = vmatprep.subr.mxu0 0.0
      %295 = vmatpush1.msra.mxu0 0.0
      %296 = vmatprep.subr.mxu0 0.0
      %297 = vmatpush1.msra.mxu0 0.0
      %298 = vmatprep.subr.mxu0 0.0
      %299 = vmatpush1.msra.mxu0 0.0
      %300 = vmatprep.subr.mxu0 0.0
      %301 = vmatpush1.msra.mxu0 0.0
      %302 = vmatprep.subr.mxu0 0.0
      %303 = vmatpush1.msra.mxu0 0.0
      %304 = vmatprep.subr.mxu0 0.0
      %305 = vmatpush1.msra.mxu0 0.0
      %306 = vmatprep.subr.mxu0 0.0
      %307 = vmatpush1.msra.mxu0 0.0
      %308 = vmatprep.subr.mxu0 0.0
      %309 = vmatpush1.msra.mxu0 0.0
      %310 = vmatprep.subr.mxu0 0.0
      %311 = vmatpush1.msra.mxu0 0.0
      %312 = vmatprep.subr.mxu0 0.0
      %313 = vmatpush1.msra.mxu0 0.0
      %314 = vmatprep.subr.mxu0 0.0
      %315 = vmatpush1.msra.mxu0 0.0
      %316 = vmatprep.subr.mxu0 0.0
      %317 = vmatpush1.msra.mxu0 0.0
      %318 = vmatprep.subr.mxu0 0.0
      %319 = vmatpush1.msra.mxu0 0.0
      %320 = vmatprep.subr.mxu0 0.0
      %321 = vmatpush1.msra.mxu0 0.0
      %322 = vmatprep.mubr.f32.mxu0 0.0
      %323 = vmatmul.mubr.f32.gmra.mrb[0].mxu0 %v247
      %v324 = vpop.f32.mrb[0].mxu0
      %v325 = vadd.f32 0.0, %v324
      %v326 = vpop.f32.mrb[0].mxu0
      %v327 = vadd.f32 0.0, %v326
      %328 = vmatprep.mubr.f32.mxu0 0.0
      %329 = vmatmul.mubr.f32.gmra.mrb[0].mxu0 %v250
      %v330 = vpop.f32.mrb[0].mxu0
      %v331 = vadd.f32 0.0, %v330
      %v332 = vpop.f32.mrb[0].mxu0
      %v333 = vadd.f32 0.0, %v332
      %334 = vmatprep.mubr.f32.mxu0 0.0
      %335 = vmatmul.mubr.f32.gmra.mrb[0].mxu0 %v253
      %v336 = vpop.f32.mrb[0].mxu0
      %v337 = vadd.f32 0.0, %v336
      %v338 = vpop.f32.mrb[0].mxu0
      %v339 = vadd.f32 0.0, %v338
      %340 = vmatprep.mubr.f32.mxu0 0.0
      %341 = vmatmul.mubr.f32.gmra.mrb[0].mxu0 %v256
      %v342 = vpop.f32.mrb[0].mxu0
      %v343 = vadd.f32 0.0, %v342
      %v344 = vpop.f32.mrb[0].mxu0
      %v345 = vadd.f32 0.0, %v344
      %346 = vdwg.mxu0
      %v347 = vld [vmem:[%s2] sm:$0xff]
      %v348 = vld [vmem:[%s2 + $0x8] sm:$0xff]
      %v349 = vld [vmem:[%s2 + $0x10] sm:$0xff]
      %v350 = vld [vmem:[%s2 + $0x18] sm:$0xff]
      %352 = vset.pattern.permute.xlu0 0
      %353 = vperm.xlu0 %352, %v347
      %v354 = vpop.permute.xlu0 %353
      %357 = vset.pattern.permute.xlu0 0
      %358 = vperm.xlu0 %357, %v348
      %v359 = vpop.permute.xlu0 %358
      %362 = vset.pattern.permute.xlu0 0
      %363 = vperm.xlu0 %362, %v349
      %v364 = vpop.permute.xlu0 %363
      %367 = vset.pattern.permute.xlu0 0
      %368 = vperm.xlu0 %367, %v350
      %v369 = vpop.permute.xlu0 %368
      %v371 = vmul.f32 %v325, %v354
      %v372 = vmul.f32 %v327, %v354
      %v373 = vmul.f32 %v331, %v359
      %v374 = vmul.f32 %v333, %v359
      %v375 = vmul.f32 %v337, %v364
      %v376 = vmul.f32 %v339, %v364
      %v377 = vmul.f32 %v343, %v369
      %v378 = vmul.f32 %v345, %v369
      %v379 = vld [vmem:[%s3] sm:$0xff]
      %v380 = vld [vmem:[%s3 + $0x8] sm:$0xff]
      %v381 = vld [vmem:[%s3 + $0x10] sm:$0xff]
      %v382 = vld [vmem:[%s3 + $0x18] sm:$0xff]
      %384 = vset.pattern.permute.xlu0 0
      %385 = vperm.xlu0 %384, %v379
      %v386 = vpop.permute.xlu0 %385
      %389 = vset.pattern.permute.xlu0 0
      %390 = vperm.xlu0 %389, %v380
      %v391 = vpop.permute.xlu0 %390
      %394 = vset.pattern.permute.xlu0 0
      %395 = vperm.xlu0 %394, %v381
      %v396 = vpop.permute.xlu0 %395
      %399 = vset.pattern.permute.xlu0 0
      %400 = vperm.xlu0 %399, %v382
      %v401 = vpop.permute.xlu0 %400
      %v403 = vadd.f32 %v371, %v386
      %v404 = vadd.f32 %v372, %v386
      %v405 = vadd.f32 %v373, %v391
      %v406 = vadd.f32 %v374, %v391
      %v407 = vadd.f32 %v375, %v396
      %v408 = vadd.f32 %v376, %v396
      %v409 = vadd.f32 %v377, %v401
      %v410 = vadd.f32 %v378, %v401
      %v411 = vadd.f32 %v403, 3.0
      %v412 = vadd.f32 %v404, 3.0
      %v413 = vadd.f32 %v405, 3.0
      %v414 = vadd.f32 %v406, 3.0
      %v415 = vadd.f32 %v407, 3.0
      %v416 = vadd.f32 %v408, 3.0
      %v417 = vadd.f32 %v409, 3.0
      %v418 = vadd.f32 %v410, 3.0
      %v419 = vmax.f32 %v411, 0.0
      %v420 = vmax.f32 %v412, 0.0
      %v421 = vmax.f32 %v413, 0.0
      %v422 = vmax.f32 %v414, 0.0
      %v423 = vmax.f32 %v415, 0.0
      %v424 = vmax.f32 %v416, 0.0
      %v425 = vmax.f32 %v417, 0.0
      %v426 = vmax.f32 %v418, 0.0
      %v427 = vmin.f32 %v419, 6.0
      %v428 = vmin.f32 %v420, 6.0
      %v429 = vmin.f32 %v421, 6.0
      %v430 = vmin.f32 %v422, 6.0
      %v431 = vmin.f32 %v423, 6.0
      %v432 = vmin.f32 %v424, 6.0
      %v433 = vmin.f32 %v425, 6.0
      %v434 = vmin.f32 %v426, 6.0
      %v435 = vmul.f32 %v427, 0.16666667
      %v436 = vmul.f32 %v428, 0.16666667
      %v437 = vmul.f32 %v429, 0.16666667
      %v438 = vmul.f32 %v430, 0.16666667
      %v439 = vmul.f32 %v431, 0.16666667
      %v440 = vmul.f32 %v432, 0.16666667
      %v441 = vmul.f32 %v433, 0.16666667
      %v442 = vmul.f32 %v434, 0.16666667
      %v443 = vmul.f32 %v403, %v435
      %v444 = vmul.f32 %v404, %v436
      %v445 = vmul.f32 %v405, %v437
      %v446 = vmul.f32 %v406, %v438
      %v447 = vmul.f32 %v407, %v439
      %v448 = vmul.f32 %v408, %v440
      %v449 = vmul.f32 %v409, %v441
      %v450 = vmul.f32 %v410, %v442
      %451 = vst [vmem:[%s235] sm:$0xff] %v443
      %452 = vst [vmem:[%s235 + $0x8] sm:$0xff] %v444
      %453 = vst [vmem:[%s235 + $0x10] sm:$0xff] %v445
      %454 = vst [vmem:[%s235 + $0x18] sm:$0xff] %v446
      %455 = vst [vmem:[%s235 + $0x20] sm:$0xff] %v447
      %456 = vst [vmem:[%s235 + $0x28] sm:$0xff] %v448
      %457 = vst [vmem:[%s235 + $0x30] sm:$0xff] %v449
      %458 = vst [vmem:[%s235 + $0x38] sm:$0xff] %v450
      %s459 = smul.u32 2, %s20
      %p460 = scmp.lt.s32.totalorder %s19, 1
      %s461 = scalar_select %p460, %s19, 1
      %p462 = scmp.lt.s32.totalorder %s459, 1
      %s463 = scalar_select %p462, %s459, 1
      %s464 = smul.addr %s461, 8
      %s465 = sadd.s32 %s463, %s464
      %s466 = smul.addr %s465, 8
      %s467 = scalar_lea.vmem %s4, %s466
      // Predicated region
      $region37: #{mobile_bottleneck.4} parent=35 // pred_check
        %p468 = pneg %p138
      $region38: #{mobile_bottleneck.4} parent=35 // pred_check_branch
        %470 = sbr.rel (%p468) target = $region40
      $region39: #{mobile_bottleneck.4} parent=35 // pred_region
        %s471 = smul.u32 2, %s20
      $region40: #{mobile_bottleneck.4} parent=35 // pred_fallthru
        _
    $region36: #{mobile_bottleneck.4} parent=5 // pred_fallthru
      _
    %p472 = scmp.le.s32.totalorder 2, %s10
    // Predicated region
    $region41: #{mobile_bottleneck.4} parent=5 // pred_check
      %p473 = pneg %p472
    $region42: #{mobile_bottleneck.4} parent=5 // pred_check_branch
      %475 = sbr.rel (%p473) target = $region44
    $region43: #{mobile_bottleneck.4} parent=5 // pred_region
      %s476 = ssub.s32 %s10, 2
      // Predicated region
      $region45: #{mobile_bottleneck.4} parent=43 // pred_check
        %p477 = pneg %p144
      $region46: #{mobile_bottleneck.4} parent=43 // pred_check_branch
        %479 = sbr.rel (%p477) target = $region48
      $region47: #{mobile_bottleneck.4} parent=43 // pred_region
        %s480 = smul.u32 2, %s22
        %p481 = scmp.lt.s32.totalorder %s21, 1
        %s482 = scalar_select %p481, %s21, 1
        %p483 = scmp.lt.s32.totalorder %s480, 1
        %s484 = scalar_select %p483, %s480, 1
        %s485 = smul.addr %s482, 8
        %s486 = sadd.s32 %s484, %s485
        %s487 = smul.addr %s486, 8
        %s488 = scalar_lea.vmem %s4, %s487
      $region48: #{mobile_bottleneck.4} parent=43 // pred_fallthru
        _
    $region44: #{mobile_bottleneck.4} parent=5 // pred_fallthru
      _
  $region6: #{mobile_bottleneck.4} parent=0 // loop_footer
    %s14 = sadd.s32 1, %s10
  $region7: #{mobile_bottleneck.4} parent=0 // loop_footer_branch
    %9 = sbr.rel target = $region3
  $region8: #{mobile_bottleneck.4} parent=0 // loop_exit
    _

// kernel: mobile_bottleneck.5
$region0: #{mobile_bottleneck.5}
  #allocation0 [shape = 'u32[]', space=smem, size = 0x4, offset = 0x4, fixed_abs, tag = 'smem constant byte address 0x4 - core index']
  #allocation1 [shape = 'u32[144,128]{1,0:T(1,128)}', space=vmem, size = 0x12000, scoped, tag = 'internal scratch']
  %s0 = inlined_call_operand.vmem [shape: f32[2,32,326], index: 0, kind: input, shape index: {}]
  %s1 = inlined_call_operand.vmem [shape: f32[32,9], index: 1, kind: input, shape index: {}]
  %s2 = inlined_call_operand.vmem [shape: f32[32,1], index: 2, kind: input, shape index: {}]
  %s3 = inlined_call_operand.vmem [shape: f32[32,1], index: 3, kind: input, shape index: {}]
  %s4 = inlined_call_operand.vmem [shape: f32[2,32,288], index: 4, kind: output, shape index: {}]
  %s5 = sld [smem:[#allocation0]]
  $region49: #{mobile_bottleneck.5} parent=0
    _
  %s7 = ssub.s32 1, %s5
  %s8 = scalar_select 0, %s7, %s5
  loop: start=0, step=1, limit=4
  $region2: #{mobile_bottleneck.5} parent=0 // loop_pre_header
    _
  $region3: #{mobile_bottleneck.5} parent=0 // loop_header
    %s10 = sphi 0, %s14
    %p11 = scmp.ge.s32.totalorder %s10, 4
    %s20 = sphi 0, %s22
    %s23 = sphi 0, %s20
    %s24 = sphi 0, %s23
    %s40 = sphi 0, %s24
    %s44 = sphi 0, %s44
    %s46 = sphi 0, %s44
    %s47 = sphi 0, %s46
    %s61 = sphi 0, %s47
    %s65 = sphi 0, %s65
    %s67 = sphi 0, %s65
    %s68 = sphi 0, %s67
    %s82 = sphi 0, %s68
    %s86 = sphi 0, %s86
    %s88 = sphi 0, %s86
    %s89 = sphi 0, %s88
    %s103 = sphi 0, %s89
    %s109 = sphi 0, %s111
    %s112 = sphi 0, %s109
    %s113 = sphi 0, %s112
    %s129 = sphi 0, %s113
  $region4: #{mobile_bottleneck.5} parent=0 // loop_header_branch
    %13 = sbr.rel (%p11) target = $region8
  $region5: #{mobile_bottleneck.5} parent=0 // loop_body
    %s15 = ssub.s32 %s10, 1
    %s16 = ssub.s32 %s10, 2
    %s17 = sadd.s32 %s10, 1
    %s18 = ssub.s32 %s10, %s17
    %p19 = scmp.eq.s32.totalorder %s18, 0
    %s21 = sadd.s32 %s20, 1
    %s22 = scalar_select %p19, %s20, %s21
    %p25 = pneg %p19
    %p26 = scmp.eq.s32.totalorder %s10, 1
    %p27 = por %p25, %p26
    %p28 = scmp.ne.s32.totalorder %s20, %s23
    %p29 = scmp.eq.s32.totalorder %s10, 0
    %p30 = por %p28, %p29
    %p31 = scmp.ne.s32.totalorder %s20, %s23
    %p32 = scmp.eq.s32.totalorder %s15, 1
    %p33 = por %p31, %p32
    %p34 = scmp.ne.s32.totalorder %s23, %s24
    %p35 = scmp.eq.s32.totalorder %s15, 0
    %p36 = por %p34, %p35
    %p37 = scmp.ne.s32.totalorder %s23, %s24
    %p38 = scmp.eq.s32.totalorder %s16, 1
    %p39 = por %p37, %p38
    %p41 = scmp.ne.s32.totalorder %s24, %s40
    %p42 = scmp.eq.s32.totalorder %s16, 0
    %p43 = por %p41, %p42
    %s45 = sadd.s32 %s44, 1
    %p48 = scmp.eq.s32.totalorder %s10, 1
    %p49 = scmp.ne.s32.totalorder %s44, %s46
    %p50 = scmp.eq.s32.totalorder %s10, 0
    %p51 = por %p49, %p50
    %p52 = scmp.ne.s32.totalorder %s44, %s46
    %p53 = scmp.eq.s32.totalorder %s15, 1
    %p54 = por %p52, %p53
    %p55 = scmp.ne.s32.totalorder %s46, %s47
    %p56 = scmp.eq.s32.totalorder %s15, 0
    %p57 = por %p55, %p56
    %p58 = scmp.ne.s32.totalorder %s46, %s47
    %p59 = scmp.eq.s32.totalorder %s16, 1
    %p60 = por %p58, %p59
    %p62 = scmp.ne.s32.totalorder %s47, %s61
    %p63 = scmp.eq.s32.totalorder %s16, 0
    %p64 = por %p62, %p63
    %s66 = sadd.s32 %s65, 1
    %p69 = scmp.eq.s32.totalorder %s10, 1
    %p70 = scmp.ne.s32.totalorder %s65, %s67
    %p71 = scmp.eq.s32.totalorder %s10, 0
    %p72 = por %p70, %p71
    %p73 = scmp.ne.s32.totalorder %s65, %s67
    %p74 = scmp.eq.s32.totalorder %s15, 1
    %p75 = por %p73, %p74
    %p76 = scmp.ne.s32.totalorder %s67, %s68
    %p77 = scmp.eq.s32.totalorder %s15, 0
    %p78 = por %p76, %p77
    %p79 = scmp.ne.s32.totalorder %s67, %s68
    %p80 = scmp.eq.s32.totalorder %s16, 1
    %p81 = por %p79, %p80
    %p83 = scmp.ne.s32.totalorder %s68, %s82
    %p84 = scmp.eq.s32.totalorder %s16, 0
    %p85 = por %p83, %p84
    %s87 = sadd.s32 %s86, 1
    %p90 = scmp.eq.s32.totalorder %s10, 1
    %p91 = scmp.ne.s32.totalorder %s86, %s88
    %p92 = scmp.eq.s32.totalorder %s10, 0
    %p93 = por %p91, %p92
    %p94 = scmp.ne.s32.totalorder %s86, %s88
    %p95 = scmp.eq.s32.totalorder %s15, 1
    %p96 = por %p94, %p95
    %p97 = scmp.ne.s32.totalorder %s88, %s89
    %p98 = scmp.eq.s32.totalorder %s15, 0
    %p99 = por %p97, %p98
    %p100 = scmp.ne.s32.totalorder %s88, %s89
    %p101 = scmp.eq.s32.totalorder %s16, 1
    %p102 = por %p100, %p101
    %p104 = scmp.ne.s32.totalorder %s89, %s103
    %p105 = scmp.eq.s32.totalorder %s16, 0
    %p106 = por %p104, %p105
    %s107 = ssub.s32 %s10, %s17
    %p108 = scmp.eq.s32.totalorder %s107, 0
    %s110 = sadd.s32 %s109, 1
    %s111 = scalar_select %p108, %s109, %s110
    %p114 = pneg %p108
    %p115 = scmp.eq.s32.totalorder %s10, 1
    %p116 = por %p114, %p115
    %p117 = scmp.ne.s32.totalorder %s109, %s112
    %p118 = scmp.eq.s32.totalorder %s10, 0
    %p119 = por %p117, %p118
    %p120 = scmp.ne.s32.totalorder %s109, %s112
    %p121 = scmp.eq.s32.totalorder %s15, 1
    %p122 = por %p120, %p121
    %p123 = scmp.ne.s32.totalorder %s112, %s113
    %p124 = scmp.eq.s32.totalorder %s15, 0
    %p125 = por %p123, %p124
    %p126 = scmp.ne.s32.totalorder %s112, %s113
    %p127 = scmp.eq.s32.totalorder %s16, 1
    %p128 = por %p126, %p127
    %p130 = scmp.ne.s32.totalorder %s113, %s129
    %p131 = scmp.eq.s32.totalorder %s16, 0
    %p132 = por %p130, %p131
    %p133 = scmp.le.s32.totalorder 1, %s10
    %p134 = scmp.lt.s32.totalorder %s10, 3
    %p135 = pnand %p133, %p134
    %p136 = pneg %p135
    // Predicated region
    $region9: #{mobile_bottleneck.5} parent=5 // pred_check
      _
    $region10: #{mobile_bottleneck.5} parent=5 // pred_check_branch
      %138 = sbr.rel (%p135) target = $region12
    $region11: #{mobile_bottleneck.5} parent=5 // pred_region
      %s139 = ssub.s32 %s10, 1
      // Predicated region
      $region13: #{mobile_bottleneck.5} parent=11 // pred_check
        %p140 = pneg %p57
      $region14: #{mobile_bottleneck.5} parent=11 // pred_check_branch
        %142 = sbr.rel (%p140) target = $region16
      $region15: #{mobile_bottleneck.5} parent=11 // pred_region
        _
      $region16: #{mobile_bottleneck.5} parent=11 // pred_fallthru
        _
      // Predicated region
      $region17: #{mobile_bottleneck.5} parent=11 // pred_check
        %p143 = pneg %p78
      $region18: #{mobile_bottleneck.5} parent=11 // pred_check_branch
        %145 = sbr.rel (%p143) target = $region20
      $region19: #{mobile_bottleneck.5} parent=11 // pred_region
        _
      $region20: #{mobile_bottleneck.5} parent=11 // pred_fallthru
        _
      // Predicated region
      $region21: #{mobile_bottleneck.5} parent=11 // pred_check
        %p146 = pneg %p99
      $region22: #{mobile_bottleneck.5} parent=11 // pred_check_branch
        %148 = sbr.rel (%p146) target = $region24
      $region23: #{mobile_bottleneck.5} parent=11 // pred_region
        _
      $region24: #{mobile_bottleneck.5} parent=11 // pred_fallthru
        _
    $region12: #{mobile_bottleneck.5} parent=5 // pred_fallthru
      _
    %p149 = scmp.lt.s32.totalorder %s10, 2
    // Predicated region
    $region25: #{mobile_bottleneck.5} parent=5 // pred_check
      %p150 = pneg %p149
    $region26: #{mobile_bottleneck.5} parent=5 // pred_check_branch
      %152 = sbr.rel (%p150) target = $region28
    $region27: #{mobile_bottleneck.5} parent=5 // pred_region
      // Predicated region
      $region29: #{mobile_bottleneck.5} parent=27 // pred_check
        %p153 = pneg %p30
      $region30: #{mobile_bottleneck.5} parent=27 // pred_check_branch
        %155 = sbr.rel (%p153) target = $region32
      $region31: #{mobile_bottleneck.5} parent=27 // pred_region
        %p156 = scmp.lt.s32.totalorder %s10, 1
        %s157 = scalar_select %p156, %s10, 1
        %s158 = smul.addr %s157, 12
        %s159 = smul.addr %s158, 8
        %s160 = scalar_lea.vmem %s0, %s159
      $region32: #{mobile_bottleneck.5} parent=27 // pred_fallthru
        _
    $region28: #{mobile_bottleneck.5} parent=5 // pred_fallthru
      _
    %p161 = scmp.le.s32.totalorder 1, %s10
    %p162 = scmp.lt.s32.totalorder %s10, 3
    %p163 = pnand %p161, %p162
    %p164 = pneg %p163
    // Predicated region
    $region33: #{mobile_bottleneck.5} parent=5 // pred_check
      _
    $region34: #{mobile_bottleneck.5} parent=5 // pred_check_branch
      %166 = sbr.rel (%p163) target = $region36
    $region35: #{mobile_bottleneck.5} parent=5 // pred_region
      %s167 = ssub.s32 %s10, 1
      %p168 = scmp.lt.s32.totalorder %s15, 1
      %s169 = scalar_select %p168, %s15, 1
      %s170 = smul.addr %s169, 12
      %s171 = smul.addr %s170, 8
      %s172 = scalar_lea.vmem %s0, %s171
      %p173 = pneg %p36
      %p174 = pneg %p33
      %p175 = pneg %p57
      %p176 = pneg %p54
      %p177 = pneg %p78
      %p178 = pneg %p75
      %p179 = pneg %p99
      %p180 = pneg %p96
      %p181 = pneg %p125
      %p182 = pneg %p122
      %p183 = scmp.lt.s32.totalorder %s15, 1
      %s184 = scalar_select %p183, %s15, 1
      %s185 = smul.addr %s184, 12
      %s186 = smul.addr %s185, 8
      %s187 = scalar_lea.vmem %s4, %s186
      %p188 = scmp.lt.s32.totalorder %s15, 1
      %s189 = scalar_select %p188, %s15, 1
      %s190 = smul.addr %s189, 12
      %s191 = smul.addr %s190, 8
      %s192 = scalar_lea.vmem %s0, %s191
      %p193 = scmp.lt.s32.totalorder %s15, 1
      %s194 = scalar_select %p193, %s15, 1
      %s195 = smul.addr %s194, 12
      %s196 = smul.addr %s195, 8
      %s197 = scalar_lea.vmem %s4, %s196
      %v198 = vld [vmem:[%s192] sm:$0xff]
      %v199 = vld [vmem:[%s192 + $0x8] sm:$0xff]
      %v200 = vld [vmem:[%s192 + $0x10] sm:$0xff]
      %v201 = vld [vmem:[%s192 + $0x18] sm:$0xff]
      %v202 = vld [vmem:[%s192 + $0x20] sm:$0xff]
      %v203 = vld [vmem:[%s192 + $0x28] sm:$0xff]
      %v204 = vld [vmem:[%s192 + $0x30] sm:$0xff]
      %v205 = vld [vmem:[%s192 + $0x38] sm:$0xff]
      %v206 = vld [vmem:[%s192 + $0x40] sm:$0xff]
      %v207 = vld [vmem:[%s192 + $0x48] sm:$0xff]
      %v208 = vld [vmem:[%s192 + $0x50] sm:$0xff]
      %v209 = vld [vmem:[%s192 + $0x58] sm:$0xff]
      %v210 = vld [vmem:[%s1] sm:$0xff]
      %v211 = vld [vmem:[%s1 + $0x8] sm:$0xff]
      %v212 = vld [vmem:[%s1 + $0x10] sm:$0xff]
      %v213 = vld [vmem:[%s1 + $0x18] sm:$0xff]
      %215 = vset.pattern.permute.xlu0 0
      %216 = vperm.xlu0 %215, %v210
      %v217 = vpop.permute.xlu0 %216
      %220 = vset.pattern.permute.xlu0 0
      %221 = vperm.xlu0 %220, %v211
      %v222 = vpop.permute.xlu0 %221
      %225 = vset.pattern.permute.xlu0 0
      %226 = vperm.xlu0 %225, %v212
      %v227 = vpop.permute.xlu0 %226
      %230 = vset.pattern.permute.xlu0 0
      %231 = vperm.xlu0 %230, %v213
      %v232 = vpop.permute.xlu0 %231
      %v234 = vmul.f32 %v217, %v198
      %v235 = vmul.f32 %v217, %v199
      %v236 = vmul.f32 %v217, %v200
      %v237 = vmul.f32 %v222, %v201
      %v238 = vmul.f32 %v222, %v202
      %v239 = vmul.f32 %v222, %v203
      %v240 = vmul.f32 %v227, %v204
      %v241 = vmul.f32 %v227, %v205
      %v242 = vmul.f32 %v227, %v206
      %v243 = vmul.f32 %v232, %v207
      %v244 = vmul.f32 %v232, %v208
      %v245 = vmul.f32 %v232, %v209
      %v246 = vadd.f32 %v234, 0.0
      %v247 = vadd.f32 %v235, 0.0
      %v248 = vadd.f32 %v236, 0.0
      %v249 = vadd.f32 %v237, 0.0
      %v250 = vadd.f32 %v238, 0.0
      %v251 = vadd.f32 %v239, 0.0
      %v252 = vadd.f32 %v240, 0.0
      %v253 = vadd.f32 %v241, 0.0
      %v254 = vadd.f32 %v242, 0.0
      %v255 = vadd.f32 %v243, 0.0
      %v256 = vadd.f32 %v244, 0.0
      %v257 = vadd.f32 %v245, 0.0
      %258 = vset.pattern.permute.xlu0 1
      %259 = vperm.xlu0 %258, %v210
      %v260 = vpop.permute.xlu0 %259
      %262 = vset.pattern.permute.xlu0 1
      %263 = vperm.xlu0 %262, %v211
      %v264 = vpop.permute.xlu0 %263
      %266 = vset.pattern.permute.xlu0 1
      %267 = vperm.xlu0 %266, %v212
      %v268 = vpop.permute.xlu0 %267
      %270 = vset.pattern.permute.xlu0 1
      %271 = vperm.xlu0 %270, %v213
      %v272 = vpop.permute.xlu0 %271
      %v274 = vmul.f32 %v260, %v198
      %v275 = vmul.f32 %v260, %v199
      %v276 = vmul.f32 %v260, %v200
      %v277 = vmul.f32 %v264, %v201
      %v278 = vmul.f32 %v264, %v202
      %v279 = vmul.f32 %v264, %v203
      %v280 = vmul.f32 %v268, %v204
      %v281 = vmul.f32 %v268, %v205
      %v282 = vmul.f32 %v268, %v206
      %v283 = vmul.f32 %v272, %v207
      %v284 = vmul.f32 %v272, %v208
      %v285 = vmul.f32 %v272, %v209
      %298 = vrot.lane.b32.xlu0 %v274, 127
      %v299 = vpop.permute.xlu0 %298
      %300 = vrot.lane.b32.xlu0 %v275, 127
      %v301 = vpop.permute.xlu0 %300
      %302 = vrot.lane.b32.xlu0 %v276, 127
      %v303 = vpop.permute.xlu0 %302
      %304 = vrot.lane.b32.xlu0 %v277, 127
      %v305 = vpop.permute.xlu0 %304
      %306 = vrot.lane.b32.xlu0 %v278, 127
      %v307 = vpop.permute.xlu0 %306
      %308 = vrot.lane.b32.xlu0 %v279, 127
      %v309 = vpop.permute.xlu0 %308
      %310 = vrot.lane.b32.xlu0 %v280, 127
      %v311 = vpop.permute.xlu0 %310
      %312 = vrot.lane.b32.xlu0 %v281, 127
      %v313 = vpop.permute.xlu0 %312
      %314 = vrot.lane.b32.xlu0 %v282, 127
      %v315 = vpop.permute.xlu0 %314
      %316 = vrot.lane.b32.xlu0 %v283, 127
      %v317 = vpop.permute.xlu0 %316
      %318 = vrot.lane.b32.xlu0 %v284, 127
      %v319 = vpop.permute.xlu0 %318
      %320 = vrot.lane.b32.xlu0 %v285, 127
      %v321 = vpop.permute.xlu0 %320
      %vm322 = vcmask 1039360
      %v323 = vsel %vm322, %v299, %v301
      %v324 = vsel %vm322, %v301, %v303
      %v325 = vsel %vm322, %v305, %v307
      %v326 = vsel %vm322, %v307, %v309
      %v327 = vsel %vm322, %v311, %v313
      %v328 = vsel %vm322, %v313, %v315
      %v329 = vsel %vm322, %v317, %v319
      %v330 = vsel %vm322, %v319, %v321
      %v343 = vadd.f32 %v246, %v323
      %v344 = vadd.f32 %v247, %v324
      %v345 = vadd.f32 %v248, %v303
      %v346 = vadd.f32 %v249, %v325
      %v347 = vadd.f32 %v250, %v326
      %v348 = vadd.f32 %v251, %v309
      %v349 = vadd.f32 %v252, %v327
      %v350 = vadd.f32 %v253, %v328
      %v351 = vadd.f32 %v254, %v315
      %v352 = vadd.f32 %v255, %v329
      %v353 = vadd.f32 %v256, %v330
      %v354 = vadd.f32 %v257, %v321
      %355 = vset.pattern.permute.xlu0 2
      %356 = vperm.xlu0 %355, %v210
      %v357 = vpop.permute.xlu0 %356
      %359 = vset.pattern.permute.xlu0 2
      %360 = vperm.xlu0 %359, %v211
      %v361 = vpop.permute.xlu0 %360
      %363 = vset.pattern.permute.xlu0 2
      %364 = vperm.xlu0 %363, %v212
      %v365 = vpop.permute.xlu0 %364
      %367 = vset.pattern.permute.xlu0 2
      %368 = vperm.xlu0 %367, %v213
      %v369 = vpop.permute.xlu0 %368
      %v371 = vmul.f32 %v357, %v198
      %v372 = vmul.f32 %v357, %v199
      %v373 = vmul.f32 %v357, %v200
      %v374 = vmul.f32 %v361, %v201
      %v375 = vmul.f32 %v361, %v202
      %v376 = vmul.f32 %v361, %v203
      %v377 = vmul.f32 %v365, %v204
      %v378 = vmul.f32 %v365, %v205
      %v379 = vmul.f32 %v365, %v206
      %v380 = vmul.f32 %v369, %v207
      %v381 = vmul.f32 %v369, %v208
      %v382 = vmul.f32 %v369, %v209
      %395 = vrot.lane.b32.xlu0 %v371, 126
      %v396 = vpop.permute.xlu0 %395
      %397 = vrot.lane.b32.xlu0 %v372, 126
      %v398 = vpop.permute.xlu0 %397
      %399 = vrot.lane.b32.xlu0 %v373, 126
      %v400 = vpop.permute.xlu0 %399
      %401 = vrot.lane.b32.xlu0 %v374, 126
      %v402 = vpop.permute.xlu0 %401
      %403 = vrot.lane.b32.xlu0 %v375, 126
      %v404 = vpop.permute.xlu0 %403
      %405 = vrot.lane.b32.xlu0 %v376, 126
      %v406 = vpop.permute.xlu0 %405
      %407 = vrot.lane.b32.xlu0 %v377, 126
      %v408 = vpop.permute.xlu0 %407
      %409 = vrot.lane.b32.xlu0 %v378, 126
      %v410 = vpop.permute.xlu0 %409
      %411 = vrot.lane.b32.xlu0 %v379, 126
      %v412 = vpop.permute.xlu0 %411
      %413 = vrot.lane.b32.xlu0 %v380, 126
      %v414 = vpop.permute.xlu0 %413
      %415 = vrot.lane.b32.xlu0 %v381, 126
      %v416 = vpop.permute.xlu0 %415
      %417 = vrot.lane.b32.xlu0 %v382, 126
      %v418 = vpop.permute.xlu0 %417
      %vm419 = vcmask 1031168
      %v420 = vsel %vm419, %v396, %v398
      %v421 = vsel %vm419, %v398, %v400
      %v422 = vsel %vm419, %v402, %v404
      %v423 = vsel %vm419, %v404, %v406
      %v424 = vsel %vm419, %v408, %v410
      %v425 = vsel %vm419, %v410, %v412
      %v426 = vsel %vm419, %v414, %v416
      %v427 = vsel %vm419, %v416, %v418
      %v440 = vadd.f32 %v343, %v420
      %v441 = vadd.f32 %v344, %v421
      %v442 = vadd.f32 %v345, %v400
      %v443 = vadd.f32 %v346, %v422
      %v444 = vadd.f32 %v347, %v423
      %v445 = vadd.f32 %v348, %v406
      %v446 = vadd.f32 %v349, %v424
      %v447 = vadd.f32 %v350, %v425
      %v448 = vadd.f32 %v351, %v412
      %v449 = vadd.f32 %v352, %v426
      %v450 = vadd.f32 %v353, %v427
      %v451 = vadd.f32 %v354, %v418
      %452 = vset.pattern.permute.xlu0 3
      %453 = vperm.xlu0 %452, %v210
      %v454 = vpop.permute.xlu0 %453
      %456 = vset.pattern.permute.xlu0 3
      %457 = vperm.xlu0 %456, %v211
      %v458 = vpop.permute.xlu0 %457
      %460 = vset.pattern.permute.xlu0 3
      %461 = vperm.xlu0 %460, %v212
      %v462 = vpop.permute.xlu0 %461
      %464 = vset.pattern.permute.xlu0 3
      %465 = vperm.xlu0 %464, %v213
      %v466 = vpop.permute.xlu0 %465
      %v468 = vmul.f32 %v454, %v198
      %v469 = vmul.f32 %v454, %v199
      %v470 = vmul.f32 %v454, %v200
      %v471 = vmul.f32 %v458, %v201
      %v472 = vmul.f32 %v458, %v202
      %v473 = vmul.f32 %v458, %v203
      %v474 = vmul.f32 %v462, %v204
      %v475 = vmul.f32 %v462, %v205
      %v476 = vmul.f32 %v462, %v206
      %v477 = vmul.f32 %v466, %v207
      %v478 = vmul.f32 %v466, %v208
      %v479 = vmul.f32 %v466, %v209
      %492 = vrot.lane.b32.xlu0 %v468, 110
      %v493 = vpop.permute.xlu0 %492
      %494 = vrot.lane.b32.xlu0 %v469, 110
      %v495 = vpop.permute.xlu0 %494
      %496 = vrot.lane.b32.xlu0 %v470, 110
      %v497 = vpop.permute.xlu0 %496
      %498 = vrot.lane.b32.xlu0 %v471, 110
      %v499 = vpop.permute.xlu0 %498
      %500 = vrot.lane.b32.xlu0 %v472, 110
      %v501 = vpop.permute.xlu0 %500
      %502 = vrot.lane.b32.xlu0 %v473, 110
      %v503 = vpop.permute.xlu0 %502
      %504 = vrot.lane.b32.xlu0 %v474, 110
      %v505 = vpop.permute.xlu0 %504
      %506 = vrot.lane.b32.xlu0 %v475, 110
      %v507 = vpop.permute.xlu0 %506
      %508 = vrot.lane.b32.xlu0 %v476, 110
      %v509 = vpop.permute.xlu0 %508
      %510 = vrot.lane.b32.xlu0 %v477, 110
      %v511 = vpop.permute.xlu0 %510
      %512 = vrot.lane.b32.xlu0 %v478, 110
      %v513 = vpop.permute.xlu0 %512
      %514 = vrot.lane.b32.xlu0 %v479, 110
      %v515 = vpop.permute.xlu0 %514
      %vm516 = vcmask 900096
      %v517 = vsel %vm516, %v493, %v495
      %v518 = vsel %vm516, %v495, %v497
      %v519 = vsel %vm516, %v499, %v501
      %v520 = vsel %vm516, %v501, %v503
      %v521 = vsel %vm516, %v505, %v507
      %v522 = vsel %vm516, %v507, %v509
      %v523 = vsel %vm516, %v511, %v513
      %v524 = vsel %vm516, %v513, %v515
      %v537 = vadd.f32 %v440, %v517
      %v538 = vadd.f32 %v441, %v518
      %v539 = vadd.f32 %v442, %v497
      %v540 = vadd.f32 %v443, %v519
      %v541 = vadd.f32 %v444, %v520
      %v542 = vadd.f32 %v445, %v503
      %v543 = vadd.f32 %v446, %v521
      %v544 = vadd.f32 %v447, %v522
      %v545 = vadd.f32 %v448, %v509
      %v546 = vadd.f32 %v449, %v523
      %v547 = vadd.f32 %v450, %v524
      %v548 = vadd.f32 %v451, %v515
      %549 = vset.pattern.permute.xlu0 4
      %550 = vperm.xlu0 %549, %v210
      %v551 = vpop.permute.xlu0 %550
      %553 = vset.pattern.permute.xlu0 4
      %554 = vperm.xlu0 %553, %v211
      %v555 = vpop.permute.xlu0 %554
      %557 = vset.pattern.permute.xlu0 4
      %558 = vperm.xlu0 %557, %v212
      %v559 = vpop.permute.xlu0 %558
      %561 = vset.pattern.permute.xlu0 4
      %562 = vperm.xlu0 %561, %v213
      %v563 = vpop.permute.xlu0 %562
      %v565 = vmul.f32 %v551, %v198
      %v566 = vmul.f32 %v551, %v199
      %v567 = vmul.f32 %v551, %v200
      %v568 = vmul.f32 %v555, %v201
      %v569 = vmul.f32 %v555, %v202
      %v570 = vmul.f32 %v555, %v203
      %v571 = vmul.f32 %v559, %v204
      %v572 = vmul.f32 %v559, %v205
      %v573 = vmul.f32 %v559, %v206
      %v574 = vmul.f32 %v563, %v207
      %v575 = vmul.f32 %v563, %v208
      %v576 = vmul.f32 %v563, %v209
      %589 = vrot.lane.b32.xlu0 %v565, 109
      %v590 = vpop.permute.xlu0 %589
      %591 = vrot.lane.b32.xlu0 %v566, 109
      %v592 = vpop.permute.xlu0 %591
      %593 = vrot.lane.b32.xlu0 %v567, 109
      %v594 = vpop.permute.xlu0 %593
      %595 = vrot.lane.b32.xlu0 %v568, 109
      %v596 = vpop.permute.xlu0 %595
      %597 = vrot.lane.b32.xlu0 %v569, 109
      %v598 = vpop.permute.xlu0 %597
      %599 = vrot.lane.b32.xlu0 %v570, 109
      %v600 = vpop.permute.xlu0 %599
      %601 = vrot.lane.b32.xlu0 %v571, 109
      %v602 = vpop.permute.xlu0 %601
      %603 = vrot.lane.b32.xlu0 %v572, 109
      %v604 = vpop.permute.xlu0 %603
      %605 = vrot.lane.b32.xlu0 %v573, 109
      %v606 = vpop.permute.xlu0 %605
      %607 = vrot.lane.b32.xlu0 %v574, 109
      %v608 = vpop.permute.xlu0 %607
      %609 = vrot.lane.b32.xlu0 %v575, 109
      %v610 = vpop.permute.xlu0 %609
      %611 = vrot.lane.b32.xlu0 %v576, 109
      %v612 = vpop.permute.xlu0 %611
      %vm613 = vcmask 891904
      %v614 = vsel %vm613, %v590, %v592
      %v615 = vsel %vm613, %v592, %v594
      %v616 = vsel %vm613, %v596, %v598
      %v617 = vsel %vm613, %v598, %v600
      %v618 = vsel %vm613, %v602, %v604
      %v619 = vsel %vm613, %v604, %v606
      %v620 = vsel %vm613, %v608, %v610
      %v621 = vsel %vm613, %v610, %v612
      %v634 = vadd.f32 %v537, %v614
      %v635 = vadd.f32 %v538, %v615
      %v636 = vadd.f32 %v539, %v594
      %v637 = vadd.f32 %v540, %v616
      %v638 = vadd.f32 %v541, %v617
      %v639 = vadd.f32 %v542, %v600
      %v640 = vadd.f32 %v543, %v618
      %v641 = vadd.f32 %v544, %v619
      %v642 = vadd.f32 %v545, %v606
      %v643 = vadd.f32 %v546, %v620
      %v644 = vadd.f32 %v547, %v621
      %v645 = vadd.f32 %v548, %v612
      %646 = vset.pattern.permute.xlu0 5
      %647 = vperm.xlu0 %646, %v210
      %v648 = vpop.permute.xlu0 %647
      %650 = vset.pattern.permute.xlu0 5
      %651 = vperm.xlu0 %650, %v211
      %v652 = vpop.permute.xlu0 %651
      %654 = vset.pattern.permute.xlu0 5
      %655 = vperm.xlu0 %654, %v212
      %v656 = vpop.permute.xlu0 %655
      %658 = vset.pattern.permute.xlu0 5
      %659 = vperm.xlu0 %658, %v213
      %v660 = vpop.permute.xlu0 %659
      %v662 = vmul.f32 %v648, %v198
      %v663 = vmul.f32 %v648, %v199
      %v664 = vmul.f32 %v648, %v200
      %v665 = vmul.f32 %v652, %v201
      %v666 = vmul.f32 %v652, %v202
      %v667 = vmul.f32 %v652, %v203
      %v668 = vmul.f32 %v656, %v204
      %v669 = vmul.f32 %v656, %v205
      %v670 = vmul.f32 %v656, %v206
      %v671 = vmul.f32 %v660, %v207
      %v672 = vmul.f32 %v660, %v208
      %v673 = vmul.f32 %v660, %v209
      %686 = vrot.lane.b32.xlu0 %v662, 108
      %v687 = vpop.permute.xlu0 %686
      %688 = vrot.lane.b32.xlu0 %v663, 108
      %v689 = vpop.permute.xlu0 %688
      %690 = vrot.lane.b32.xlu0 %v664, 108
      %v691 = vpop.permute.xlu0 %690
      %692 = vrot.lane.b32.xlu0 %v665, 108
      %v693 = vpop.permute.xlu0 %692
      %694 = vrot.lane.b32.xlu0 %v666, 108
      %v695 = vpop.permute.xlu0 %694
      %696 = vrot.lane.b32.xlu0 %v667, 108
      %v697 = vpop.permute.xlu0 %696
      %698 = vrot.lane.b32.xlu0 %v668, 108
      %v699 = vpop.permute.xlu0 %698
      %700 = vrot.lane.b32.xlu0 %v669, 108
      %v701 = vpop.permute.xlu0 %700
      %702 = vrot.lane.b32.xlu0 %v670, 108
      %v703 = vpop.permute.xlu0 %702
      %704 = vrot.lane.b32.xlu0 %v671, 108
      %v705 = vpop.permute.xlu0 %704
      %706 = vrot.lane.b32.xlu0 %v672, 108
      %v707 = vpop.permute.xlu0 %706
      %708 = vrot.lane.b32.xlu0 %v673, 108
      %v709 = vpop.permute.xlu0 %708
      %vm710 = vcmask 883712
      %v711 = vsel %vm710, %v687, %v689
      %v712 = vsel %vm710, %v689, %v691
      %v713 = vsel %vm710, %v693, %v695
      %v714 = vsel %vm710, %v695, %v697
      %v715 = vsel %vm710, %v699, %v701
      %v716 = vsel %vm710, %v701, %v703
      %v717 = vsel %vm710, %v705, %v707
      %v718 = vsel %vm710, %v707, %v709
      %v731 = vadd.f32 %v634, %v711
      %v732 = vadd.f32 %v635, %v712
      %v733 = vadd.f32 %v636, %v691
      %v734 = vadd.f32 %v637, %v713
      %v735 = vadd.f32 %v638, %v714
      %v736 = vadd.f32 %v639, %v697
      %v737 = vadd.f32 %v640, %v715
      %v738 = vadd.f32 %v641, %v716
      %v739 = vadd.f32 %v642, %v703
      %v740 = vadd.f32 %v643, %v717
      %v741 = vadd.f32 %v644, %v718
      %v742 = vadd.f32 %v645, %v709
      %743 = vset.pattern.permute.xlu0 6
      %744 = vperm.xlu0 %743, %v210
      %v745 = vpop.permute.xlu0 %744
      %747 = vset.pattern.permute.xlu0 6
      %748 = vperm.xlu0 %747, %v211
      %v749 = vpop.permute.xlu0 %748
      %751 = vset.pattern.permute.xlu0 6
      %752 = vperm.xlu0 %751, %v212
      %v753 = vpop.permute.xlu0 %752
      %755 = vset.pattern.permute.xlu0 6
      %756 = vperm.xlu0 %755, %v213
      %v757 = vpop.permute.xlu0 %756
      %v759 = vmul.f32 %v745, %v198
      %v760 = vmul.f32 %v745, %v199
      %v761 = vmul.f32 %v745, %v200
      %v762 = vmul.f32 %v749, %v201
      %v763 = vmul.f32 %v749, %v202
      %v764 = vmul.f32 %v749, %v203
      %v765 = vmul.f32 %v753, %v204
      %v766 = vmul.f32 %v753, %v205
      %v767 = vmul.f32 %v753, %v206
      %v768 = vmul.f32 %v757, %v207
      %v769 = vmul.f32 %v757, %v208
      %v770 = vmul.f32 %v757, %v209
      %783 = vrot.lane.b32.xlu0 %v759, 92
      %v784 = vpop.permute.xlu0 %783
      %785 = vrot.lane.b32.xlu0 %v760, 92
      %v786 = vpop.permute.xlu0 %785
      %787 = vrot.lane.b32.xlu0 %v761, 92
      %v788 = vpop.permute.xlu0 %787
      %789 = vrot.lane.b32.xlu0 %v762, 92
      %v790 = vpop.permute.xlu0 %789
      %791 = vrot.lane.b32.xlu0 %v763, 92
      %v792 = vpop.permute.xlu0 %791
      %793 = vrot.lane.b32.xlu0 %v764, 92
      %v794 = vpop.permute.xlu0 %793
      %795 = vrot.lane.b32.xlu0 %v765, 92
      %v796 = vpop.permute.xlu0 %795
      %797 = vrot.lane.b32.xlu0 %v766, 92
      %v798 = vpop.permute.xlu0 %797
      %799 = vrot.lane.b32.xlu0 %v767, 92
      %v800 = vpop.permute.xlu0 %799
      %801 = vrot.lane.b32.xlu0 %v768, 92
      %v802 = vpop.permute.xlu0 %801
      %803 = vrot.lane.b32.xlu0 %v769, 92
      %v804 = vpop.permute.xlu0 %803
      %805 = vrot.lane.b32.xlu0 %v770, 92
      %v806 = vpop.permute.xlu0 %805
      %vm807 = vcmask 752640
      %v808 = vsel %vm807, %v784, %v786
      %v809 = vsel %vm807, %v786, %v788
      %v810 = vsel %vm807, %v790, %v792
      %v811 = vsel %vm807, %v792, %v794
      %v812 = vsel %vm807, %v796, %v798
      %v813 = vsel %vm807, %v798, %v800
      %v814 = vsel %vm807, %v802, %v804
      %v815 = vsel %vm807, %v804, %v806
      %v828 = vadd.f32 %v731, %v808
      %v829 = vadd.f32 %v732, %v809
      %v830 = vadd.f32 %v733, %v788
      %v831 = vadd.f32 %v734, %v810
      %v832 = vadd.f32 %v735, %v811
      %v833 = vadd.f32 %v736, %v794
      %v834 = vadd.f32 %v737, %v812
      %v835 = vadd.f32 %v738, %v813
      %v836 = vadd.f32 %v739, %v800
      %v837 = vadd.f32 %v740, %v814
      %v838 = vadd.f32 %v741, %v815
      %v839 = vadd.f32 %v742, %v806
      %840 = vset.pattern.permute.xlu0 7
      %841 = vperm.xlu0 %840, %v210
      %v842 = vpop.permute.xlu0 %841
      %844 = vset.pattern.permute.xlu0 7
      %845 = vperm.xlu0 %844, %v211
      %v846 = vpop.permute.xlu0 %845
      %848 = vset.pattern.permute.xlu0 7
      %849 = vperm.xlu0 %848, %v212
      %v850 = vpop.permute.xlu0 %849
      %852 = vset.pattern.permute.xlu0 7
      %853 = vperm.xlu0 %852, %v213
      %v854 = vpop.permute.xlu0 %853
      %v856 = vmul.f32 %v842, %v198
      %v857 = vmul.f32 %v842, %v199
      %v858 = vmul.f32 %v842, %v200
      %v859 = vmul.f32 %v846, %v201
      %v860 = vmul.f32 %v846, %v202
      %v861 = vmul.f32 %v846, %v203
      %v862 = vmul.f32 %v850, %v204
      %v863 = vmul.f32 %v850, %v205
      %v864 = vmul.f32 %v850, %v206
      %v865 = vmul.f32 %v854, %v207
      %v866 = vmul.f32 %v854, %v208
      %v867 = vmul.f32 %v854, %v209
      %880 = vrot.lane.b32.xlu0 %v856, 91
      %v881 = vpop.permute.xlu0 %880
      %882 = vrot.lane.b32.xlu0 %v857, 91
      %v883 = vpop.permute.xlu0 %882
      %884 = vrot.lane.b32.xlu0 %v858, 91
      %v885 = vpop.permute.xlu0 %884
      %886 = vrot.lane.b32.xlu0 %v859, 91
      %v887 = vpop.permute.xlu0 %886
      %888 = vrot.lane.b32.xlu0 %v860, 91
      %v889 = vpop.permute.xlu0 %888
      %890 = vrot.lane.b32.xlu0 %v861, 91
      %v891 = vpop.permute.xlu0 %890
      %892 = vrot.lane.b32.xlu0 %v862, 91
      %v893 = vpop.permute.xlu0 %892
      %894 = vrot.lane.b32.xlu0 %v863, 91
      %v895 = vpop.permute.xlu0 %894
      %896 = vrot.lane.b32.xlu0 %v864, 91
      %v897 = vpop.permute.xlu0 %896
      %898 = vrot.lane.b32.xlu0 %v865, 91
      %v899 = vpop.permute.xlu0 %898
      %900 = vrot.lane.b32.xlu0 %v866, 91
      %v901 = vpop.permute.xlu0 %900
      %902 = vrot.lane.b32.xlu0 %v867, 91
      %v903 = vpop.permute.xlu0 %902
      %vm904 = vcmask 744448
      %v905 = vsel %vm904, %v881, %v883
      %v906 = vsel %vm904, %v883, %v885
      %v907 = vsel %vm904, %v887, %v889
      %v908 = vsel %vm904, %v889, %v891
      %v909 = vsel %vm904, %v893, %v895
      %v910 = vsel %vm904, %v895, %v897
      %v911 = vsel %vm904, %v899, %v901
      %v912 = vsel %vm904, %v901, %v903
      %v925 = vadd.f32 %v828, %v905
      %v926 = vadd.f32 %v829, %v906
      %v927 = vadd.f32 %v830, %v885
      %v928 = vadd.f32 %v831, %v907
      %v929 = vadd.f32 %v832, %v908
      %v930 = vadd.f32 %v833, %v891
      %v931 = vadd.f32 %v834, %v909
      %v932 = vadd.f32 %v835, %v910
      %v933 = vadd.f32 %v836, %v897
      %v934 = vadd.f32 %v837, %v911
      %v935 = vadd.f32 %v838, %v912
      %v936 = vadd.f32 %v839, %v903
      %937 = vset.pattern.permute.xlu0 8
      %938 = vperm.xlu0 %937, %v210
      %v939 = vpop.permute.xlu0 %938
      %941 = vset.pattern.permute.xlu0 8
      %942 = vperm.xlu0 %941, %v211
      %v943 = vpop.permute.xlu0 %942
      %945 = vset.pattern.permute.xlu0 8
      %946 = vperm.xlu0 %945, %v212
      %v947 = vpop.permute.xlu0 %946
      %949 = vset.pattern.permute.xlu0 8
      %950 = vperm.xlu0 %949, %v213
      %v951 = vpop.permute.xlu0 %950
      %v953 = vmul.f32 %v939, %v198
      %v954 = vmul.f32 %v939, %v199
      %v955 = vmul.f32 %v939, %v200
      %v956 = vmul.f32 %v943, %v201
      %v957 = vmul.f32 %v943, %v202
      %v958 = vmul.f32 %v943, %v203
      %v959 = vmul.f32 %v947, %v204
      %v960 = vmul.f32 %v947, %v205
      %v961 = vmul.f32 %v947, %v206
      %v962 = vmul.f32 %v951, %v207
      %v963 = vmul.f32 %v951, %v208
      %v964 = vmul.f32 %v951, %v209
      %977 = vrot.lane.b32.xlu0 %v953, 90
      %v978 = vpop.permute.xlu0 %977
      %979 = vrot.lane.b32.xlu0 %v954, 90
      %v980 = vpop.permute.xlu0 %979
      %981 = vrot.lane.b32.xlu0 %v955, 90
      %v982 = vpop.permute.xlu0 %981
      %983 = vrot.lane.b32.xlu0 %v956, 90
      %v984 = vpop.permute.xlu0 %983
      %985 = vrot.lane.b32.xlu0 %v957, 90
      %v986 = vpop.permute.xlu0 %985
      %987 = vrot.lane.b32.xlu0 %v958, 90
      %v988 = vpop.permute.xlu0 %987
      %989 = vrot.lane.b32.xlu0 %v959, 90
      %v990 = vpop.permute.xlu0 %989
      %991 = vrot.lane.b32.xlu0 %v960, 90
      %v992 = vpop.permute.xlu0 %991
      %993 = vrot.lane.b32.xlu0 %v961, 90
      %v994 = vpop.permute.xlu0 %993
      %995 = vrot.lane.b32.xlu0 %v962, 90
      %v996 = vpop.permute.xlu0 %995
      %997 = vrot.lane.b32.xlu0 %v963, 90
      %v998 = vpop.permute.xlu0 %997
      %999 = vrot.lane.b32.xlu0 %v964, 90
      %v1000 = vpop.permute.xlu0 %999
      %vm1001 = vcmask 736256
      %v1002 = vsel %vm1001, %v978, %v980
      %v1003 = vsel %vm1001, %v980, %v982
      %v1004 = vsel %vm1001, %v984, %v986
      %v1005 = vsel %vm1001, %v986, %v988
      %v1006 = vsel %vm1001, %v990, %v992
      %v1007 = vsel %vm1001, %v992, %v994
      %v1008 = vsel %vm1001, %v996, %v998
      %v1009 = vsel %vm1001, %v998, %v1000
      %v1022 = vadd.f32 %v925, %v1002
      %v1023 = vadd.f32 %v926, %v1003
      %v1024 = vadd.f32 %v927, %v982
      %v1025 = vadd.f32 %v928, %v1004
      %v1026 = vadd.f32 %v929, %v1005
      %v1027 = vadd.f32 %v930, %v988
      %v1028 = vadd.f32 %v931, %v1006
      %v1029 = vadd.f32 %v932, %v1007
      %v1030 = vadd.f32 %v933, %v994
      %v1031 = vadd.f32 %v934, %v1008
      %v1032 = vadd.f32 %v935, %v1009
      %v1033 = vadd.f32 %v936, %v1000
      %v1034 = vld [vmem:[%s2] sm:$0xff]
      %v1035 = vld [vmem:[%s2 + $0x8] sm:$0xff]
      %v1036 = vld [vmem:[%s2 + $0x10] sm:$0xff]
      %v1037 = vld [vmem:[%s2 + $0x18] sm:$0xff]
      %1039 = vset.pattern.permute.xlu0 0
      %1040 = vperm.xlu0 %1039, %v1034
      %v1041 = vpop.permute.xlu0 %1040
      %1044 = vset.pattern.permute.xlu0 0
      %1045 = vperm.xlu0 %1044, %v1035
      %v1046 = vpop.permute.xlu0 %1045
      %1049 = vset.pattern.permute.xlu0 0
      %1050 = vperm.xlu0 %1049, %v1036
      %v1051 = vpop.permute.xlu0 %1050
      %1054 = vset.pattern.permute.xlu0 0
      %1055 = vperm.xlu0 %1054, %v1037
      %v1056 = vpop.permute.xlu0 %1055
      %v1058 = vmul.f32 %v1022, %v1041
      %v1059 = vmul.f32 %v1023, %v1041
      %v1060 = vmul.f32 %v1024, %v1041
      %v1061 = vmul.f32 %v1025, %v1046
      %v1062 = vmul.f32 %v1026, %v1046
      %v1063 = vmul.f32 %v1027, %v1046
      %v1064 = vmul.f32 %v1028, %v1051
      %v1065 = vmul.f32 %v1029, %v1051
      %v1066 = vmul.f32 %v1030, %v1051
      %v1067 = vmul.f32 %v1031, %v1056
      %v1068 = vmul.f32 %v1032, %v1056
      %v1069 = vmul.f32 %v1033, %v1056
      %v1070 = vld [vmem:[%s3] sm:$0xff]
      %v1071 = vld [vmem:[%s3 + $0x8] sm:$0xff]
      %v1072 = vld [vmem:[%s3 + $0x10] sm:$0xff]
      %v1073 = vld [vmem:[%s3 + $0x18] sm:$0xff]
      %1075 = vset.pattern.permute.xlu0 0
      %1076 = vperm.xlu0 %1075, %v1070
      %v1077 = vpop.permute.xlu0 %1076
      %1080 = vset.pattern.permute.xlu0 0
      %1081 = vperm.xlu0 %1080, %v1071
      %v1082 = vpop.permute.xlu0 %1081
      %1085 = vset.pattern.permute.xlu0 0
      %1086 = vperm.xlu0 %1085, %v1072
      %v1087 = vpop.permute.xlu0 %1086
      %1090 = vset.pattern.permute.xlu0 0
      %1091 = vperm.xlu0 %1090, %v1073
      %v1092 = vpop.permute.xlu0 %1091
      %v1094 = vadd.f32 %v1058, %v1077
      %v1095 = vadd.f32 %v1059, %v1077
      %v1096 = vadd.f32 %v1060, %v1077
      %v1097 = vadd.f32 %v1061, %v1082
      %v1098 = vadd.f32 %v1062, %v1082
      %v1099 = vadd.f32 %v1063, %v1082
      %v1100 = vadd.f32 %v1064, %v1087
      %v1101 = vadd.f32 %v1065, %v1087
      %v1102 = vadd.f32 %v1066, %v1087
      %v1103 = vadd.f32 %v1067, %v1092
      %v1104 = vadd.f32 %v1068, %v1092
      %v1105 = vadd.f32 %v1069, %v1092
      %1106 = vst [vmem:[%s197] sm:$0xff] %v1094
      %1107 = vst [vmem:[%s197 + $0x8] sm:$0xff] %v1095
      %vm1108 = vcmask 261120
      %1109 = vst.msk [vmem:[%s197 + $0x10] sm:$0xff] %vm1108, %v1096
      %1110 = vst [vmem:[%s197 + $0x18] sm:$0xff] %v1097
      %1111 = vst [vmem:[%s197 + $0x20] sm:$0xff] %v1098
      %1112 = vst.msk [vmem:[%s197 + $0x28] sm:$0xff] %vm1108, %v1099
      %1113 = vst [vmem:[%s197 + $0x30] sm:$0xff] %v1100
      %1114 = vst [vmem:[%s197 + $0x38] sm:$0xff] %v1101
      %1115 = vst.msk [vmem:[%s197 + $0x40] sm:$0xff] %vm1108, %v1102
      %1116 = vst [vmem:[%s197 + $0x48] sm:$0xff] %v1103
      %1117 = vst [vmem:[%s197 + $0x50] sm:$0xff] %v1104
      %1118 = vst.msk [vmem:[%s197 + $0x58] sm:$0xff] %vm1108, %v1105
      %p1119 = scmp.lt.s32.totalorder %s15, 1
      %s1120 = scalar_select %p1119, %s15, 1
      %s1121 = smul.addr %s1120, 12
      %s1122 = smul.addr %s1121, 8
      %s1123 = scalar_lea.vmem %s4, %s1122
      // Predicated region
      $region37: #{mobile_bottleneck.5} parent=35 // pred_check
        %p1124 = pneg %p122
      $region38: #{mobile_bottleneck.5} parent=35 // pred_check_branch
        %1126 = sbr.rel (%p1124) target = $region40
      $region39: #{mobile_bottleneck.5} parent=35 // pred_region
        _
      $region40: #{mobile_bottleneck.5} parent=35 // pred_fallthru
        _
    $region36: #{mobile_bottleneck.5} parent=5 // pred_fallthru
      _
    %p1127 = scmp.le.s32.totalorder 2, %s10
    // Predicated region
    $region41: #{mobile_bottleneck.5} parent=5 // pred_check
      %p1128 = pneg %p1127
    $region42: #{mobile_bottleneck.5} parent=5 // pred_check_branch
      %1130 = sbr.rel (%p1128) target = $region44
    $region43: #{mobile_bottleneck.5} parent=5 // pred_region
      %s1131 = ssub.s32 %s10, 2
      // Predicated region
      $region45: #{mobile_bottleneck.5} parent=43 // pred_check
        %p1132 = pneg %p128
      $region46: #{mobile_bottleneck.5} parent=43 // pred_check_branch
        %1134 = sbr.rel (%p1132) target = $region48
      $region47: #{mobile_bottleneck.5} parent=43 // pred_region
        %p1135 = scmp.lt.s32.totalorder %s16, 1
        %s1136 = scalar_select %p1135, %s16, 1
        %s1137 = smul.addr %s1136, 12
        %s1138 = smul.addr %s1137, 8
        %s1139 = scalar_lea.vmem %s4, %s1138
      $region48: #{mobile_bottleneck.5} parent=43 // pred_fallthru
        _
    $region44: #{mobile_bottleneck.5} parent=5 // pred_fallthru
      _
  $region6: #{mobile_bottleneck.5} parent=0 // loop_footer
    %s14 = sadd.s32 1, %s10
  $region7: #{mobile_bottleneck.5} parent=0 // loop_footer_branch
    %9 = sbr.rel target = $region3
  $region8: #{mobile_bottleneck.5} parent=0 // loop_exit
    _

// kernel: mobile_bottleneck.6
$region0: #{mobile_bottleneck.6}
  #allocation0 [shape = 'u32[]', space=smem, size = 0x4, offset = 0x4, fixed_abs, tag = 'smem constant byte address 0x4 - core index']
  #allocation1 [shape = 'u32[144,128]{1,0:T(1,128)}', space=vmem, size = 0x12000, scoped, tag = 'internal scratch']
  %s0 = inlined_call_operand.vmem [shape: f32[2,32,256], index: 0, kind: input, shape index: {}]
  %s1 = inlined_call_operand.vmem [shape: f32[32,8], index: 1, kind: input, shape index: {}]
  %s2 = inlined_call_operand.vmem [shape: f32[32,8], index: 2, kind: input, shape index: {}]
  %s3 = inlined_call_operand.vmem [shape: f32[2,32,1], index: 3, kind: output, shape index: {}]
  %s4 = sld [smem:[#allocation0]]
  $region45: #{mobile_bottleneck.6} parent=0
    _
  %s6 = ssub.s32 1, %s4
  %s7 = scalar_select 0, %s6, %s4
  loop: start=0, step=1, limit=4
  $region2: #{mobile_bottleneck.6} parent=0 // loop_pre_header
    _
  $region3: #{mobile_bottleneck.6} parent=0 // loop_header
    %s9 = sphi 0, %s13
    %p10 = scmp.ge.s32.totalorder %s9, 4
    %s19 = sphi 0, %s21
    %s22 = sphi 0, %s19
    %s23 = sphi 0, %s22
    %s39 = sphi 0, %s23
    %s43 = sphi 0, %s43
    %s45 = sphi 0, %s43
    %s46 = sphi 0, %s45
    %s60 = sphi 0, %s46
    %s64 = sphi 0, %s64
    %s66 = sphi 0, %s64
    %s67 = sphi 0, %s66
    %s81 = sphi 0, %s67
    %s87 = sphi 0, %s89
    %s90 = sphi 0, %s87
    %s91 = sphi 0, %s90
    %s107 = sphi 0, %s91
  $region4: #{mobile_bottleneck.6} parent=0 // loop_header_branch
    %12 = sbr.rel (%p10) target = $region8
  $region5: #{mobile_bottleneck.6} parent=0 // loop_body
    %s14 = ssub.s32 %s9, 1
    %s15 = ssub.s32 %s9, 2
    %s16 = sadd.s32 %s9, 1
    %s17 = ssub.s32 %s9, %s16
    %p18 = scmp.eq.s32.totalorder %s17, 0
    %s20 = sadd.s32 %s19, 1
    %s21 = scalar_select %p18, %s19, %s20
    %p24 = pneg %p18
    %p25 = scmp.eq.s32.totalorder %s9, 1
    %p26 = por %p24, %p25
    %p27 = scmp.ne.s32.totalorder %s19, %s22
    %p28 = scmp.eq.s32.totalorder %s9, 0
    %p29 = por %p27, %p28
    %p30 = scmp.ne.s32.totalorder %s19, %s22
    %p31 = scmp.eq.s32.totalorder %s14, 1
    %p32 = por %p30, %p31
    %p33 = scmp.ne.s32.totalorder %s22, %s23
    %p34 = scmp.eq.s32.totalorder %s14, 0
    %p35 = por %p33, %p34
    %p36 = scmp.ne.s32.totalorder %s22, %s23
    %p37 = scmp.eq.s32.totalorder %s15, 1
    %p38 = por %p36, %p37
    %p40 = scmp.ne.s32.totalorder %s23, %s39
    %p41 = scmp.eq.s32.totalorder %s15, 0
    %p42 = por %p40, %p41
    %s44 = sadd.s32 %s43, 1
    %p47 = scmp.eq.s32.totalorder %s9, 1
    %p48 = scmp.ne.s32.totalorder %s43, %s45
    %p49 = scmp.eq.s32.totalorder %s9, 0
    %p50 = por %p48, %p49
    %p51 = scmp.ne.s32.totalorder %s43, %s45
    %p52 = scmp.eq.s32.totalorder %s14, 1
    %p53 = por %p51, %p52
    %p54 = scmp.ne.s32.totalorder %s45, %s46
    %p55 = scmp.eq.s32.totalorder %s14, 0
    %p56 = por %p54, %p55
    %p57 = scmp.ne.s32.totalorder %s45, %s46
    %p58 = scmp.eq.s32.totalorder %s15, 1
    %p59 = por %p57, %p58
    %p61 = scmp.ne.s32.totalorder %s46, %s60
    %p62 = scmp.eq.s32.totalorder %s15, 0
    %p63 = por %p61, %p62
    %s65 = sadd.s32 %s64, 1
    %p68 = scmp.eq.s32.totalorder %s9, 1
    %p69 = scmp.ne.s32.totalorder %s64, %s66
    %p70 = scmp.eq.s32.totalorder %s9, 0
    %p71 = por %p69, %p70
    %p72 = scmp.ne.s32.totalorder %s64, %s66
    %p73 = scmp.eq.s32.totalorder %s14, 1
    %p74 = por %p72, %p73
    %p75 = scmp.ne.s32.totalorder %s66, %s67
    %p76 = scmp.eq.s32.totalorder %s14, 0
    %p77 = por %p75, %p76
    %p78 = scmp.ne.s32.totalorder %s66, %s67
    %p79 = scmp.eq.s32.totalorder %s15, 1
    %p80 = por %p78, %p79
    %p82 = scmp.ne.s32.totalorder %s67, %s81
    %p83 = scmp.eq.s32.totalorder %s15, 0
    %p84 = por %p82, %p83
    %s85 = ssub.s32 %s9, %s16
    %p86 = scmp.eq.s32.totalorder %s85, 0
    %s88 = sadd.s32 %s87, 1
    %s89 = scalar_select %p86, %s87, %s88
    %p92 = pneg %p86
    %p93 = scmp.eq.s32.totalorder %s9, 1
    %p94 = por %p92, %p93
    %p95 = scmp.ne.s32.totalorder %s87, %s90
    %p96 = scmp.eq.s32.totalorder %s9, 0
    %p97 = por %p95, %p96
    %p98 = scmp.ne.s32.totalorder %s87, %s90
    %p99 = scmp.eq.s32.totalorder %s14, 1
    %p100 = por %p98, %p99
    %p101 = scmp.ne.s32.totalorder %s90, %s91
    %p102 = scmp.eq.s32.totalorder %s14, 0
    %p103 = por %p101, %p102
    %p104 = scmp.ne.s32.totalorder %s90, %s91
    %p105 = scmp.eq.s32.totalorder %s15, 1
    %p106 = por %p104, %p105
    %p108 = scmp.ne.s32.totalorder %s91, %s107
    %p109 = scmp.eq.s32.totalorder %s15, 0
    %p110 = por %p108, %p109
    %p111 = scmp.le.s32.totalorder 1, %s9
    %p112 = scmp.lt.s32.totalorder %s9, 3
    %p113 = pnand %p111, %p112
    %p114 = pneg %p113
    // Predicated region
    $region9: #{mobile_bottleneck.6} parent=5 // pred_check
      _
    $region10: #{mobile_bottleneck.6} parent=5 // pred_check_branch
      %116 = sbr.rel (%p113) target = $region12
    $region11: #{mobile_bottleneck.6} parent=5 // pred_region
      %s117 = ssub.s32 %s9, 1
      // Predicated region
      $region13: #{mobile_bottleneck.6} parent=11 // pred_check
        %p118 = pneg %p56
      $region14: #{mobile_bottleneck.6} parent=11 // pred_check_branch
        %120 = sbr.rel (%p118) target = $region16
      $region15: #{mobile_bottleneck.6} parent=11 // pred_region
        _
      $region16: #{mobile_bottleneck.6} parent=11 // pred_fallthru
        _
      // Predicated region
      $region17: #{mobile_bottleneck.6} parent=11 // pred_check
        %p121 = pneg %p77
      $region18: #{mobile_bottleneck.6} parent=11 // pred_check_branch
        %123 = sbr.rel (%p121) target = $region20
      $region19: #{mobile_bottleneck.6} parent=11 // pred_region
        _
      $region20: #{mobile_bottleneck.6} parent=11 // pred_fallthru
        _
    $region12: #{mobile_bottleneck.6} parent=5 // pred_fallthru
      _
    %p124 = scmp.lt.s32.totalorder %s9, 2
    // Predicated region
    $region21: #{mobile_bottleneck.6} parent=5 // pred_check
      %p125 = pneg %p124
    $region22: #{mobile_bottleneck.6} parent=5 // pred_check_branch
      %127 = sbr.rel (%p125) target = $region24
    $region23: #{mobile_bottleneck.6} parent=5 // pred_region
      // Predicated region
      $region25: #{mobile_bottleneck.6} parent=23 // pred_check
        %p128 = pneg %p29
      $region26: #{mobile_bottleneck.6} parent=23 // pred_check_branch
        %130 = sbr.rel (%p128) target = $region28
      $region27: #{mobile_bottleneck.6} parent=23 // pred_region
        %p131 = scmp.lt.s32.totalorder %s9, 1
        %s132 = scalar_select %p131, %s9, 1
        %s133 = smul.addr %s132, 8
        %s134 = smul.addr %s133, 8
        %s135 = scalar_lea.vmem %s0, %s134
      $region28: #{mobile_bottleneck.6} parent=23 // pred_fallthru
        _
    $region24: #{mobile_bottleneck.6} parent=5 // pred_fallthru
      _
    %p136 = scmp.le.s32.totalorder 1, %s9
    %p137 = scmp.lt.s32.totalorder %s9, 3
    %p138 = pnand %p136, %p137
    %p139 = pneg %p138
    // Predicated region
    $region29: #{mobile_bottleneck.6} parent=5 // pred_check
      _
    $region30: #{mobile_bottleneck.6} parent=5 // pred_check_branch
      %141 = sbr.rel (%p138) target = $region32
    $region31: #{mobile_bottleneck.6} parent=5 // pred_region
      %s142 = ssub.s32 %s9, 1
      %p143 = scmp.lt.s32.totalorder %s14, 1
      %s144 = scalar_select %p143, %s14, 1
      %s145 = smul.addr %s144, 8
      %s146 = smul.addr %s145, 8
      %s147 = scalar_lea.vmem %s0, %s146
      %p148 = pneg %p35
      %p149 = pneg %p32
      %p150 = pneg %p56
      %p151 = pneg %p53
      %p152 = pneg %p77
      %p153 = pneg %p74
      %p154 = pneg %p103
      %p155 = pneg %p100
      %p156 = scmp.lt.s32.totalorder %s14, 1
      %s157 = scalar_select %p156, %s14, 1
      %s158 = smul.addr %s157, 4
      %s159 = smul.addr %s158, 8
      %s160 = scalar_lea.vmem %s3, %s159
      %p161 = scmp.lt.s32.totalorder %s14, 1
      %s162 = scalar_select %p161, %s14, 1
      %s163 = smul.addr %s162, 8
      %s164 = smul.addr %s163, 8
      %s165 = scalar_lea.vmem %s0, %s164
      %p166 = scmp.lt.s32.totalorder %s14, 1
      %s167 = scalar_select %p166, %s14, 1
      %s168 = smul.addr %s167, 4
      %s169 = smul.addr %s168, 8
      %s170 = scalar_lea.vmem %s3, %s169
      %v171 = vld [vmem:[%s165] sm:$0xff]
      %v172 = vld [vmem:[%s165 + $0x8] sm:$0xff]
      %v173 = vld [vmem:[%s165 + $0x10] sm:$0xff]
      %v174 = vld [vmem:[%s165 + $0x18] sm:$0xff]
      %v175 = vld [vmem:[%s165 + $0x20] sm:$0xff]
      %v176 = vld [vmem:[%s165 + $0x28] sm:$0xff]
      %v177 = vld [vmem:[%s165 + $0x30] sm:$0xff]
      %v178 = vld [vmem:[%s165 + $0x38] sm:$0xff]
      %v179 = vadd.f32 %v171, %v172
      %180 = vadd.xlane.f32.xlu0 %v179
      %v181 = vpop.xlane.xlu0 %180
      %v182 = vadd.f32 %v173, %v174
      %183 = vadd.xlane.f32.xlu0 %v182
      %v184 = vpop.xlane.xlu0 %183
      %v185 = vadd.f32 %v175, %v176
      %186 = vadd.xlane.f32.xlu0 %v185
      %v187 = vpop.xlane.xlu0 %186
      %v188 = vadd.f32 %v177, %v178
      %189 = vadd.xlane.f32.xlu0 %v188
      %v190 = vpop.xlane.xlu0 %189
      %v191 = vmul.f32 %v181, 0.00390625
      %v192 = vmul.f32 %v184, 0.00390625
      %v193 = vmul.f32 %v187, 0.00390625
      %v194 = vmul.f32 %v190, 0.00390625
      %v195 = vld [vmem:[%s1] sm:$0xff]
      %v196 = vld [vmem:[%s1 + $0x8] sm:$0xff]
      %v197 = vld [vmem:[%s1 + $0x10] sm:$0xff]
      %v198 = vld [vmem:[%s1 + $0x18] sm:$0xff]
      %v199 = vmul.f32 %v195, %v191
      %v200 = vmul.f32 %v196, %v192
      %v201 = vmul.f32 %v197, %v193
      %v202 = vmul.f32 %v198, %v194
      %vm203 = vcmask 64512
      %v204 = vsel %vm203, %v199, 0.0
      %v205 = vsel %vm203, %v200, 0.0
      %v206 = vadd.f32 %v204, %v205
      %v207 = vsel %vm203, %v201, 0.0
      %v208 = vadd.f32 %v206, %v207
      %v209 = vsel %vm203, %v202, 0.0
      %v210 = vadd.f32 %v208, %v209
      %v211 = vrot.slane %v210, 4
      %v212 = vadd.f32 %v210, %v211
      %v213 = vrot.slane %v212, 2
      %v214 = vadd.f32 %v212, %v213
      %v215 = vrot.slane %v214, 1
      %v216 = vadd.f32 %v214, %v215
      %v217 = vmax.f32 %v216, 0.0
      %v218 = vld [vmem:[%s2] sm:$0xff]
      %v219 = vld [vmem:[%s2 + $0x8] sm:$0xff]
      %v220 = vld [vmem:[%s2 + $0x10] sm:$0xff]
      %v221 = vld [vmem:[%s2 + $0x18] sm:$0xff]
      %v222 = vmul.f32 %v218, %v217
      %v223 = vmul.f32 %v219, %v217
      %v224 = vmul.f32 %v220, %v217
      %v225 = vmul.f32 %v221, %v217
      %v226 = vsel %vm203, %v222, 0.0
      %227 = vadd.xlane.f32.xlu0 %v226
      %v228 = vpop.xlane.xlu0 %227
      %v229 = vsel %vm203, %v223, 0.0
      %230 = vadd.xlane.f32.xlu0 %v229
      %v231 = vpop.xlane.xlu0 %230
      %v232 = vsel %vm203, %v224, 0.0
      %233 = vadd.xlane.f32.xlu0 %v232
      %v234 = vpop.xlane.xlu0 %233
      %v235 = vsel %vm203, %v225, 0.0
      %236 = vadd.xlane.f32.xlu0 %v235
      %v237 = vpop.xlane.xlu0 %236
      %v238 = vadd.f32 %v228, 3.0
      %v239 = vadd.f32 %v231, 3.0
      %v240 = vadd.f32 %v234, 3.0
      %v241 = vadd.f32 %v237, 3.0
      %v242 = vmax.f32 %v238, 0.0
      %v243 = vmax.f32 %v239, 0.0
      %v244 = vmax.f32 %v240, 0.0
      %v245 = vmax.f32 %v241, 0.0
      %v246 = vmin.f32 %v242, 6.0
      %v247 = vmin.f32 %v243, 6.0
      %v248 = vmin.f32 %v244, 6.0
      %v249 = vmin.f32 %v245, 6.0
      %v250 = vmul.f32 %v246, 0.16666667
      %v251 = vmul.f32 %v247, 0.16666667
      %v252 = vmul.f32 %v248, 0.16666667
      %v253 = vmul.f32 %v249, 0.16666667
      %vm254 = vcmask 7168
      %255 = vst.msk [vmem:[%s170] sm:$0xff] %vm254, %v250
      %256 = vst.msk [vmem:[%s170 + $0x8] sm:$0xff] %vm254, %v251
      %257 = vst.msk [vmem:[%s170 + $0x10] sm:$0xff] %vm254, %v252
      %258 = vst.msk [vmem:[%s170 + $0x18] sm:$0xff] %vm254, %v253
      %p259 = scmp.lt.s32.totalorder %s14, 1
      %s260 = scalar_select %p259, %s14, 1
      %s261 = smul.addr %s260, 4
      %s262 = smul.addr %s261, 8
      %s263 = scalar_lea.vmem %s3, %s262
      // Predicated region
      $region33: #{mobile_bottleneck.6} parent=31 // pred_check
        %p264 = pneg %p100
      $region34: #{mobile_bottleneck.6} parent=31 // pred_check_branch
        %266 = sbr.rel (%p264) target = $region36
      $region35: #{mobile_bottleneck.6} parent=31 // pred_region
        _
      $region36: #{mobile_bottleneck.6} parent=31 // pred_fallthru
        _
    $region32: #{mobile_bottleneck.6} parent=5 // pred_fallthru
      _
    %p267 = scmp.le.s32.totalorder 2, %s9
    // Predicated region
    $region37: #{mobile_bottleneck.6} parent=5 // pred_check
      %p268 = pneg %p267
    $region38: #{mobile_bottleneck.6} parent=5 // pred_check_branch
      %270 = sbr.rel (%p268) target = $region40
    $region39: #{mobile_bottleneck.6} parent=5 // pred_region
      %s271 = ssub.s32 %s9, 2
      // Predicated region
      $region41: #{mobile_bottleneck.6} parent=39 // pred_check
        %p272 = pneg %p106
      $region42: #{mobile_bottleneck.6} parent=39 // pred_check_branch
        %274 = sbr.rel (%p272) target = $region44
      $region43: #{mobile_bottleneck.6} parent=39 // pred_region
        %p275 = scmp.lt.s32.totalorder %s15, 1
        %s276 = scalar_select %p275, %s15, 1
        %s277 = smul.addr %s276, 4
        %s278 = smul.addr %s277, 8
        %s279 = scalar_lea.vmem %s3, %s278
      $region44: #{mobile_bottleneck.6} parent=39 // pred_fallthru
        _
    $region40: #{mobile_bottleneck.6} parent=5 // pred_fallthru
      _
  $region6: #{mobile_bottleneck.6} parent=0 // loop_footer
    %s13 = sadd.s32 1, %s9
  $region7: #{mobile_bottleneck.6} parent=0 // loop_footer_branch
    %8 = sbr.rel target = $region3
  $region8: #{mobile_bottleneck.6} parent=0 // loop_exit
    _

// kernel: mobile_bottleneck.7
$region0: #{mobile_bottleneck.7}
  #allocation0 [shape = 'u32[]', space=smem, size = 0x4, offset = 0x4, fixed_abs, tag = 'smem constant byte address 0x4 - core index']
  #allocation1 [shape = 'u32[144,128]{1,0:T(1,128)}', space=vmem, size = 0x12000, scoped, tag = 'internal scratch']
  %s0 = inlined_call_operand.vmem [shape: f32[2,32,256], index: 0, kind: input, shape index: {}]
  %s1 = inlined_call_operand.vmem [shape: f32[2,32,1], index: 1, kind: input, shape index: {}]
  %s2 = inlined_call_operand.vmem [shape: f32[16,32], index: 2, kind: input, shape index: {}]
  %s3 = inlined_call_operand.vmem [shape: f32[16,1], index: 3, kind: input, shape index: {}]
  %s4 = inlined_call_operand.vmem [shape: f32[16,1], index: 4, kind: input, shape index: {}]
  %s5 = inlined_call_operand.vmem [shape: f32[2,16,256], index: 5, kind: input, shape index: {}]
  %s6 = inlined_call_operand.vmem [shape: f32[2,16,256], index: 6, kind: output, shape index: {}]
  %s7 = sld [smem:[#allocation0]]
  $region57: #{mobile_bottleneck.7} parent=0
    _
  %s9 = ssub.s32 1, %s7
  %s10 = scalar_select 0, %s9, %s7
  loop: start=0, step=1, limit=4
  $region2: #{mobile_bottleneck.7} parent=0 // loop_pre_header
    _
  $region3: #{mobile_bottleneck.7} parent=0 // loop_header
    %s12 = sphi 0, %s16
    %p13 = scmp.ge.s32.totalorder %s12, 4
    %s19 = sphi 0, %s31
    %s20 = sphi 0, %s27
    %s21 = sphi 0, %s19
    %s22 = sphi 0, %s20
    %s23 = sphi 0, %s21
    %s24 = sphi 0, %s22
    %s36 = sphi 0, %s38
    %s39 = sphi 0, %s36
    %s40 = sphi 0, %s39
    %s56 = sphi 0, %s40
    %s62 = sphi 0, %s64
    %s65 = sphi 0, %s62
    %s66 = sphi 0, %s65
    %s82 = sphi 0, %s66
    %s86 = sphi 0, %s86
    %s88 = sphi 0, %s86
    %s89 = sphi 0, %s88
    %s103 = sphi 0, %s89
    %s107 = sphi 0, %s107
    %s109 = sphi 0, %s107
    %s110 = sphi 0, %s109
    %s124 = sphi 0, %s110
    %s128 = sphi 0, %s128
    %s130 = sphi 0, %s128
    %s131 = sphi 0, %s130
    %s145 = sphi 0, %s131
    %s153 = sphi 0, %s155
    %s156 = sphi 0, %s153
    %s157 = sphi 0, %s156
    %s173 = sphi 0, %s157
    %s181 = sphi 0, %s183
    %s184 = sphi 0, %s181
    %s185 = sphi 0, %s184
    %s201 = sphi 0, %s185
  $region4: #{mobile_bottleneck.7} parent=0 // loop_header_branch
    %15 = sbr.rel (%p13) target = $region8
  $region5: #{mobile_bottleneck.7} parent=0 // loop_body
    %s17 = ssub.s32 %s12, 1
    %s18 = ssub.s32 %s12, 2
    %s25 = sadd.s32 1, %s20
    %p26 = scmp.ge.s32.totalorder %s25, 1
    %s27 = scalar_select %p26, 0, %s25
    %s28 = sadd.s32 1, %s19
    %s29 = scalar_select %p26, %s28, %s19
    %p30 = scmp.ge.s32.totalorder %s29, 2
    %s31 = scalar_select %p30, 0, %s29
    %s32 = ssub.s32 %s19, %s31
    %s33 = ssub.s32 %s20, %s27
    %s34 = sor.u32 %s32, %s33
    %p35 = scmp.eq.s32.totalorder %s34, 0
    %s37 = sadd.s32 %s36, 1
    %s38 = scalar_select %p35, %s36, %s37
    %p41 = pneg %p35
    %p42 = scmp.eq.s32.totalorder %s12, 1
    %p43 = por %p41, %p42
    %p44 = scmp.ne.s32.totalorder %s36, %s39
    %p45 = scmp.eq.s32.totalorder %s12, 0
    %p46 = por %p44, %p45
    %p47 = scmp.ne.s32.totalorder %s36, %s39
    %p48 = scmp.eq.s32.totalorder %s17, 1
    %p49 = por %p47, %p48
    %p50 = scmp.ne.s32.totalorder %s39, %s40
    %p51 = scmp.eq.s32.totalorder %s17, 0
    %p52 = por %p50, %p51
    %p53 = scmp.ne.s32.totalorder %s39, %s40
    %p54 = scmp.eq.s32.totalorder %s18, 1
    %p55 = por %p53, %p54
    %p57 = scmp.ne.s32.totalorder %s40, %s56
    %p58 = scmp.eq.s32.totalorder %s18, 0
    %p59 = por %p57, %p58
    %s60 = ssub.s32 %s19, %s31
    %p61 = scmp.eq.s32.totalorder %s60, 0
    %s63 = sadd.s32 %s62, 1
    %s64 = scalar_select %p61, %s62, %s63
    %p67 = pneg %p61
    %p68 = scmp.eq.s32.totalorder %s12, 1
    %p69 = por %p67, %p68
    %p70 = scmp.ne.s32.totalorder %s62, %s65
    %p71 = scmp.eq.s32.totalorder %s12, 0
    %p72 = por %p70, %p71
    %p73 = scmp.ne.s32.totalorder %s62, %s65
    %p74 = scmp.eq.s32.totalorder %s17, 1
    %p75 = por %p73, %p74
    %p76 = scmp.ne.s32.totalorder %s65, %s66
    %p77 = scmp.eq.s32.totalorder %s17, 0
    %p78 = por %p76, %p77
    %p79 = scmp.ne.s32.totalorder %s65, %s66
    %p80 = scmp.eq.s32.totalorder %s18, 1
    %p81 = por %p79, %p80
    %p83 = scmp.ne.s32.totalorder %s66, %s82
    %p84 = scmp.eq.s32.totalorder %s18, 0
    %p85 = por %p83, %p84
    %s87 = sadd.s32 %s86, 1
    %p90 = scmp.eq.s32.totalorder %s12, 1
    %p91 = scmp.ne.s32.totalorder %s86, %s88
    %p92 = scmp.eq.s32.totalorder %s12, 0
    %p93 = por %p91, %p92
    %p94 = scmp.ne.s32.totalorder %s86, %s88
    %p95 = scmp.eq.s32.totalorder %s17, 1
    %p96 = por %p94, %p95
    %p97 = scmp.ne.s32.totalorder %s88, %s89
    %p98 = scmp.eq.s32.totalorder %s17, 0
    %p99 = por %p97, %p98
    %p100 = scmp.ne.s32.totalorder %s88, %s89
    %p101 = scmp.eq.s32.totalorder %s18, 1
    %p102 = por %p100, %p101
    %p104 = scmp.ne.s32.totalorder %s89, %s103
    %p105 = scmp.eq.s32.totalorder %s18, 0
    %p106 = por %p104, %p105
    %s108 = sadd.s32 %s107, 1
    %p111 = scmp.eq.s32.totalorder %s12, 1
    %p112 = scmp.ne.s32.totalorder %s107, %s109
    %p113 = scmp.eq.s32.totalorder %s12, 0
    %p114 = por %p112, %p113
    %p115 = scmp.ne.s32.totalorder %s107, %s109
    %p116 = scmp.eq.s32.totalorder %s17, 1
    %p117 = por %p115, %p116
    %p118 = scmp.ne.s32.totalorder %s109, %s110
    %p119 = scmp.eq.s32.totalorder %s17, 0
    %p120 = por %p118, %p119
    %p121 = scmp.ne.s32.totalorder %s109, %s110
    %p122 = scmp.eq.s32.totalorder %s18, 1
    %p123 = por %p121, %p122
    %p125 = scmp.ne.s32.totalorder %s110, %s124
    %p126 = scmp.eq.s32.totalorder %s18, 0
    %p127 = por %p125, %p126
    %s129 = sadd.s32 %s128, 1
    %p132 = scmp.eq.s32.totalorder %s12, 1
    %p133 = scmp.ne.s32.totalorder %s128, %s130
    %p134 = scmp.eq.s32.totalorder %s12, 0
    %p135 = por %p133, %p134
    %p136 = scmp.ne.s32.totalorder %s128, %s130
    %p137 = scmp.eq.s32.totalorder %s17, 1
    %p138 = por %p136, %p137
    %p139 = scmp.ne.s32.totalorder %s130, %s131
    %p140 = scmp.eq.s32.totalorder %s17, 0
    %p141 = por %p139, %p140
    %p142 = scmp.ne.s32.totalorder %s130, %s131
    %p143 = scmp.eq.s32.totalorder %s18, 1
    %p144 = por %p142, %p143
    %p146 = scmp.ne.s32.totalorder %s131, %s145
    %p147 = scmp.eq.s32.totalorder %s18, 0
    %p148 = por %p146, %p147
    %s149 = ssub.s32 %s19, %s31
    %s150 = ssub.s32 %s20, %s27
    %s151 = sor.u32 %s149, %s150
    %p152 = scmp.eq.s32.totalorder %s151, 0
    %s154 = sadd.s32 %s153, 1
    %s155 = scalar_select %p152, %s153, %s154
    %p158 = pneg %p152
    %p159 = scmp.eq.s32.totalorder %s12, 1
    %p160 = por %p158, %p159
    %p161 = scmp.ne.s32.totalorder %s153, %s156
    %p162 = scmp.eq.s32.totalorder %s12, 0
    %p163 = por %p161, %p162
    %p164 = scmp.ne.s32.totalorder %s153, %s156
    %p165 = scmp.eq.s32.totalorder %s17, 1
    %p166 = por %p164, %p165
    %p167 = scmp.ne.s32.totalorder %s156, %s157
    %p168 = scmp.eq.s32.totalorder %s17, 0
    %p169 = por %p167, %p168
    %p170 = scmp.ne.s32.totalorder %s156, %s157
    %p171 = scmp.eq.s32.totalorder %s18, 1
    %p172 = por %p170, %p171
    %p174 = scmp.ne.s32.totalorder %s157, %s173
    %p175 = scmp.eq.s32.totalorder %s18, 0
    %p176 = por %p174, %p175
    %s177 = ssub.s32 %s19, %s31
    %s178 = ssub.s32 %s20, %s27
    %s179 = sor.u32 %s177, %s178
    %p180 = scmp.eq.s32.totalorder %s179, 0
    %s182 = sadd.s32 %s181, 1
    %s183 = scalar_select %p180, %s181, %s182
    %p186 = pneg %p180
    %p187 = scmp.eq.s32.totalorder %s12, 1
    %p188 = por %p186, %p187
    %p189 = scmp.ne.s32.totalorder %s181, %s184
    %p190 = scmp.eq.s32.totalorder %s12, 0
    %p191 = por %p189, %p190
    %p192 = scmp.ne.s32.totalorder %s181, %s184
    %p193 = scmp.eq.s32.totalorder %s17, 1
    %p194 = por %p192, %p193
    %p195 = scmp.ne.s32.totalorder %s184, %s185
    %p196 = scmp.eq.s32.totalorder %s17, 0
    %p197 = por %p195, %p196
    %p198 = scmp.ne.s32.totalorder %s184, %s185
    %p199 = scmp.eq.s32.totalorder %s18, 1
    %p200 = por %p198, %p199
    %p202 = scmp.ne.s32.totalorder %s185, %s201
    %p203 = scmp.eq.s32.totalorder %s18, 0
    %p204 = por %p202, %p203
    %p205 = scmp.le.s32.totalorder 1, %s12
    %p206 = scmp.lt.s32.totalorder %s12, 3
    %p207 = pnand %p205, %p206
    %p208 = pneg %p207
    // Predicated region
    $region9: #{mobile_bottleneck.7} parent=5 // pred_check
      _
    $region10: #{mobile_bottleneck.7} parent=5 // pred_check_branch
      %210 = sbr.rel (%p207) target = $region12
    $region11: #{mobile_bottleneck.7} parent=5 // pred_region
      %s211 = ssub.s32 %s12, 1
      // Predicated region
      $region13: #{mobile_bottleneck.7} parent=11 // pred_check
        %p212 = pneg %p99
      $region14: #{mobile_bottleneck.7} parent=11 // pred_check_branch
        %214 = sbr.rel (%p212) target = $region16
      $region15: #{mobile_bottleneck.7} parent=11 // pred_region
        _
      $region16: #{mobile_bottleneck.7} parent=11 // pred_fallthru
        _
      // Predicated region
      $region17: #{mobile_bottleneck.7} parent=11 // pred_check
        %p215 = pneg %p120
      $region18: #{mobile_bottleneck.7} parent=11 // pred_check_branch
        %217 = sbr.rel (%p215) target = $region20
      $region19: #{mobile_bottleneck.7} parent=11 // pred_region
        _
      $region20: #{mobile_bottleneck.7} parent=11 // pred_fallthru
        _
      // Predicated region
      $region21: #{mobile_bottleneck.7} parent=11 // pred_check
        %p218 = pneg %p141
      $region22: #{mobile_bottleneck.7} parent=11 // pred_check_branch
        %220 = sbr.rel (%p218) target = $region24
      $region23: #{mobile_bottleneck.7} parent=11 // pred_region
        _
      $region24: #{mobile_bottleneck.7} parent=11 // pred_fallthru
        _
    $region12: #{mobile_bottleneck.7} parent=5 // pred_fallthru
      _
    %p221 = scmp.lt.s32.totalorder %s12, 2
    // Predicated region
    $region25: #{mobile_bottleneck.7} parent=5 // pred_check
      %p222 = pneg %p221
    $region26: #{mobile_bottleneck.7} parent=5 // pred_check_branch
      %224 = sbr.rel (%p222) target = $region28
    $region27: #{mobile_bottleneck.7} parent=5 // pred_region
      // Predicated region
      $region29: #{mobile_bottleneck.7} parent=27 // pred_check
        %p225 = pneg %p46
      $region30: #{mobile_bottleneck.7} parent=27 // pred_check_branch
        %227 = sbr.rel (%p225) target = $region32
      $region31: #{mobile_bottleneck.7} parent=27 // pred_region
        %s228 = smul.u32 2, %s20
        %p229 = scmp.lt.s32.totalorder %s19, 1
        %s230 = scalar_select %p229, %s19, 1
        %p231 = scmp.lt.s32.totalorder %s228, 1
        %s232 = scalar_select %p231, %s228, 1
        %s233 = smul.addr %s230, 8
        %s234 = sadd.s32 %s232, %s233
        %s235 = smul.addr %s234, 8
        %s236 = scalar_lea.vmem %s0, %s235
        %s237 = smul.u32 2, %s20
      $region32: #{mobile_bottleneck.7} parent=27 // pred_fallthru
        _
      // Predicated region
      $region33: #{mobile_bottleneck.7} parent=27 // pred_check
        %p238 = pneg %p72
      $region34: #{mobile_bottleneck.7} parent=27 // pred_check_branch
        %240 = sbr.rel (%p238) target = $region36
      $region35: #{mobile_bottleneck.7} parent=27 // pred_region
        %p241 = scmp.lt.s32.totalorder %s19, 1
        %s242 = scalar_select %p241, %s19, 1
        %s243 = smul.addr %s242, 4
        %s244 = smul.addr %s243, 8
        %s245 = scalar_lea.vmem %s1, %s244
      $region36: #{mobile_bottleneck.7} parent=27 // pred_fallthru
        _
      // Predicated region
      $region37: #{mobile_bottleneck.7} parent=27 // pred_check
        %p246 = pneg %p163
      $region38: #{mobile_bottleneck.7} parent=27 // pred_check_branch
        %248 = sbr.rel (%p246) target = $region40
      $region39: #{mobile_bottleneck.7} parent=27 // pred_region
        %s249 = smul.u32 2, %s20
        %p250 = scmp.lt.s32.totalorder %s19, 1
        %s251 = scalar_select %p250, %s19, 1
        %p252 = scmp.lt.s32.totalorder %s249, 1
        %s253 = scalar_select %p252, %s249, 1
        %s254 = smul.addr %s251, 4
        %s255 = sadd.s32 %s253, %s254
        %s256 = smul.addr %s255, 8
        %s257 = scalar_lea.vmem %s5, %s256
        %s258 = smul.u32 2, %s20
      $region40: #{mobile_bottleneck.7} parent=27 // pred_fallthru
        _
    $region28: #{mobile_bottleneck.7} parent=5 // pred_fallthru
      _
    %p259 = scmp.le.s32.totalorder 1, %s12
    %p260 = scmp.lt.s32.totalorder %s12, 3
    %p261 = pnand %p259, %p260
    %p262 = pneg %p261
    // Predicated region
    $region41: #{mobile_bottleneck.7} parent=5 // pred_check
      _
    $region42: #{mobile_bottleneck.7} parent=5 // pred_check_branch
      %264 = sbr.rel (%p261) target = $region44
    $region43: #{mobile_bottleneck.7} parent=5 // pred_region
      %s265 = ssub.s32 %s12, 1
      %s266 = smul.u32 2, %s22
      %p267 = scmp.lt.s32.totalorder %s21, 1
      %s268 = scalar_select %p267, %s21, 1
      %p269 = scmp.lt.s32.totalorder %s266, 1
      %s270 = scalar_select %p269, %s266, 1
      %s271 = smul.addr %s268, 8
      %s272 = sadd.s32 %s270, %s271
      %s273 = smul.addr %s272, 8
      %s274 = scalar_lea.vmem %s0, %s273
      %p275 = pneg %p52
      %p276 = pneg %p49
      %p277 = scmp.lt.s32.totalorder %s21, 1
      %s278 = scalar_select %p277, %s21, 1
      %s279 = smul.addr %s278, 4
      %s280 = smul.addr %s279, 8
      %s281 = scalar_lea.vmem %s1, %s280
      %p282 = pneg %p78
      %p283 = pneg %p75
      %p284 = pneg %p99
      %p285 = pneg %p96
      %p286 = pneg %p120
      %p287 = pneg %p117
      %p288 = pneg %p141
      %p289 = pneg %p138
      %s290 = smul.u32 2, %s22
      %p291 = scmp.lt.s32.totalorder %s21, 1
      %s292 = scalar_select %p291, %s21, 1
      %p293 = scmp.lt.s32.totalorder %s290, 1
      %s294 = scalar_select %p293, %s290, 1
      %s295 = smul.addr %s292, 4
      %s296 = sadd.s32 %s294, %s295
      %s297 = smul.addr %s296, 8
      %s298 = scalar_lea.vmem %s5, %s297
      %p299 = pneg %p169
      %p300 = pneg %p166
      %p301 = pneg %p197
      %p302 = pneg %p194
      %s303 = smul.u32 2, %s22
      %p304 = scmp.lt.s32.totalorder %s21, 1
      %s305 = scalar_select %p304, %s21, 1
      %p306 = scmp.lt.s32.totalorder %s303, 1
      %s307 = scalar_select %p306, %s303, 1
      %s308 = smul.addr %s305, 4
      %s309 = sadd.s32 %s307, %s308
      %s310 = smul.addr %s309, 8
      %s311 = scalar_lea.vmem %s6, %s310
      %s312 = smul.u32 2, %s22
      %p313 = scmp.lt.s32.totalorder %s21, 1
      %s314 = scalar_select %p313, %s21, 1
      %p315 = scmp.lt.s32.totalorder %s312, 1
      %s316 = scalar_select %p315, %s312, 1
      %s317 = smul.addr %s314, 8
      %s318 = sadd.s32 %s316, %s317
      %s319 = smul.addr %s318, 8
      %s320 = scalar_lea.vmem %s0, %s319
      %s321 = smul.u32 2, %s22
      %p322 = scmp.lt.s32.totalorder %s21, 1
      %s323 = scalar_select %p322, %s21, 1
      %s324 = smul.addr %s323, 4
      %s325 = smul.addr %s324, 8
      %s326 = scalar_lea.vmem %s1, %s325
      %s327 = smul.u32 2, %s22
      %p328 = scmp.lt.s32.totalorder %s21, 1
      %s329 = scalar_select %p328, %s21, 1
      %p330 = scmp.lt.s32.totalorder %s327, 1
      %s331 = scalar_select %p330, %s327, 1
      %s332 = smul.addr %s329, 4
      %s333 = sadd.s32 %s331, %s332
      %s334 = smul.addr %s333, 8
      %s335 = scalar_lea.vmem %s5, %s334
      %s336 = smul.u32 2, %s22
      %s337 = smul.u32 2, %s22
      %p338 = scmp.lt.s32.totalorder %s21, 1
      %s339 = scalar_select %p338, %s21, 1
      %p340 = scmp.lt.s32.totalorder %s337, 1
      %s341 = scalar_select %p340, %s337, 1
      %s342 = smul.addr %s339, 4
      %s343 = sadd.s32 %s341, %s342
      %s344 = smul.addr %s343, 8
      %s345 = scalar_lea.vmem %s6, %s344
      %s346 = smul.u32 2, %s22
      %v347 = vld [vmem:[%s320] sm:$0xff]
      %v348 = vld [vmem:[%s320 + $0x8] sm:$0xff]
      %v349 = vld [vmem:[%s320 + $0x10] sm:$0xff]
      %v350 = vld [vmem:[%s320 + $0x18] sm:$0xff]
      %v351 = vld [vmem:[%s320 + $0x20] sm:$0xff]
      %v352 = vld [vmem:[%s320 + $0x28] sm:$0xff]
      %v353 = vld [vmem:[%s320 + $0x30] sm:$0xff]
      %v354 = vld [vmem:[%s320 + $0x38] sm:$0xff]
      %v355 = vld [vmem:[%s326] sm:$0xff]
      %v356 = vld [vmem:[%s326 + $0x8] sm:$0xff]
      %v357 = vld [vmem:[%s326 + $0x10] sm:$0xff]
      %v358 = vld [vmem:[%s326 + $0x18] sm:$0xff]
      %360 = vset.pattern.permute.xlu0 0
      %361 = vperm.xlu0 %360, %v355
      %v362 = vpop.permute.xlu0 %361
      %365 = vset.pattern.permute.xlu0 0
      %366 = vperm.xlu0 %365, %v356
      %v367 = vpop.permute.xlu0 %366
      %370 = vset.pattern.permute.xlu0 0
      %371 = vperm.xlu0 %370, %v357
      %v372 = vpop.permute.xlu0 %371
      %375 = vset.pattern.permute.xlu0 0
      %376 = vperm.xlu0 %375, %v358
      %v377 = vpop.permute.xlu0 %376
      %v379 = vmul.f32 %v347, %v362
      %v380 = vmul.f32 %v348, %v362
      %v381 = vmul.f32 %v349, %v367
      %v382 = vmul.f32 %v350, %v367
      %v383 = vmul.f32 %v351, %v372
      %v384 = vmul.f32 %v352, %v372
      %v385 = vmul.f32 %v353, %v377
      %v386 = vmul.f32 %v354, %v377
      %v387 = vadd.f32 %v379, 3.0
      %v388 = vadd.f32 %v380, 3.0
      %v389 = vadd.f32 %v381, 3.0
      %v390 = vadd.f32 %v382, 3.0
      %v391 = vadd.f32 %v383, 3.0
      %v392 = vadd.f32 %v384, 3.0
      %v393 = vadd.f32 %v385, 3.0
      %v394 = vadd.f32 %v386, 3.0
      %v395 = vmax.f32 %v387, 0.0
      %v396 = vmax.f32 %v388, 0.0
      %v397 = vmax.f32 %v389, 0.0
      %v398 = vmax.f32 %v390, 0.0
      %v399 = vmax.f32 %v391, 0.0
      %v400 = vmax.f32 %v392, 0.0
      %v401 = vmax.f32 %v393, 0.0
      %v402 = vmax.f32 %v394, 0.0
      %v403 = vmin.f32 %v395, 6.0
      %v404 = vmin.f32 %v396, 6.0
      %v405 = vmin.f32 %v397, 6.0
      %v406 = vmin.f32 %v398, 6.0
      %v407 = vmin.f32 %v399, 6.0
      %v408 = vmin.f32 %v400, 6.0
      %v409 = vmin.f32 %v401, 6.0
      %v410 = vmin.f32 %v402, 6.0
      %v411 = vmul.f32 %v403, 0.16666667
      %v412 = vmul.f32 %v404, 0.16666667
      %v413 = vmul.f32 %v405, 0.16666667
      %v414 = vmul.f32 %v406, 0.16666667
      %v415 = vmul.f32 %v407, 0.16666667
      %v416 = vmul.f32 %v408, 0.16666667
      %v417 = vmul.f32 %v409, 0.16666667
      %v418 = vmul.f32 %v410, 0.16666667
      %v419 = vmul.f32 %v379, %v411
      %v420 = vmul.f32 %v380, %v412
      %v421 = vmul.f32 %v381, %v413
      %v422 = vmul.f32 %v382, %v414
      %v423 = vmul.f32 %v383, %v415
      %v424 = vmul.f32 %v384, %v416
      %v425 = vmul.f32 %v385, %v417
      %v426 = vmul.f32 %v386, %v418
      %v427 = vld [vmem:[%s2] sm:$0xff]
      %v428 = vld [vmem:[%s2 + $0x8] sm:$0xff]
      %vm429 = vcmask 261120
      %v431 = vsel %vm429, %v427, 0
      %v434 = vsel %vm429, %v428, 0
      %436 = vmatprep.subr.mxu0 %v420
      %437 = vmatpush1.msra.mxu0 %v419
      %438 = vmatprep.subr.mxu0 %v422
      %439 = vmatpush1.msra.mxu0 %v421
      %440 = vmatprep.subr.mxu0 %v424
      %441 = vmatpush1.msra.mxu0 %v423
      %442 = vmatprep.subr.mxu0 %v426
      %443 = vmatpush1.msra.mxu0 %v425
      %444 = vmatprep.subr.mxu0 0.0
      %445 = vmatpush1.msra.mxu0 0.0
      %446 = vmatprep.subr.mxu0 0.0
      %447 = vmatpush1.msra.mxu0 0.0
      %448 = vmatprep.subr.mxu0 0.0
      %449 = vmatpush1.msra.mxu0 0.0
      %450 = vmatprep.subr.mxu0 0.0
      %451 = vmatpush1.msra.mxu0 0.0
      %452 = vmatprep.subr.mxu0 0.0
      %453 = vmatpush1.msra.mxu0 0.0
      %454 = vmatprep.subr.mxu0 0.0
      %455 = vmatpush1.msra.mxu0 0.0
      %456 = vmatprep.subr.mxu0 0.0
      %457 = vmatpush1.msra.mxu0 0.0
      %458 = vmatprep.subr.mxu0 0.0
      %459 = vmatpush1.msra.mxu0 0.0
      %460 = vmatprep.subr.mxu0 0.0
      %461 = vmatpush1.msra.mxu0 0.0
      %462 = vmatprep.subr.mxu0 0.0
      %463 = vmatpush1.msra.mxu0 0.0
      %464 = vmatprep.subr.mxu0 0.0
      %465 = vmatpush1.msra.mxu0 0.0
      %466 = vmatprep.subr.mxu0 0.0
      %467 = vmatpush1.msra.mxu0 0.0
      %468 = vmatprep.subr.mxu0 0.0
      %469 = vmatpush1.msra.mxu0 0.0
      %470 = vmatprep.subr.mxu0 0.0
      %471 = vmatpush1.msra.mxu0 0.0
      %472 = vmatprep.subr.mxu0 0.0
      %473 = vmatpush1.msra.mxu0 0.0
      %474 = vmatprep.subr.mxu0 0.0
      %475 = vmatpush1.msra.mxu0 0.0
      %476 = vmatprep.subr.mxu0 0.0
      %477 = vmatpush1.msra.mxu0 0.0
      %478 = vmatprep.subr.mxu0 0.0
      %479 = vmatpush1.msra.mxu0 0.0
      %480 = vmatprep.subr.mxu0 0.0
      %481 = vmatpush1.msra.mxu0 0.0
      %482 = vmatprep.subr.mxu0 0.0
      %483 = vmatpush1.msra.mxu0 0.0
      %484 = vmatprep.subr.mxu0 0.0
      %485 = vmatpush1.msra.mxu0 0.0
      %486 = vmatprep.subr.mxu0 0.0
      %487 = vmatpush1.msra.mxu0 0.0
      %488 = vmatprep.subr.mxu0 0.0
      %489 = vmatpush1.msra.mxu0 0.0
      %490 = vmatprep.subr.mxu0 0.0
      %491 = vmatpush1.msra.mxu0 0.0
      %492 = vmatprep.subr.mxu0 0.0
      %493 = vmatpush1.msra.mxu0 0.0
      %494 = vmatprep.subr.mxu0 0.0
      %495 = vmatpush1.msra.mxu0 0.0
      %496 = vmatprep.subr.mxu0 0.0
      %497 = vmatpush1.msra.mxu0 0.0
      %498 = vmatprep.subr.mxu0 0.0
      %499 = vmatpush1.msra.mxu0 0.0
      %500 = vmatprep.mubr.f32.mxu0 0.0
      %501 = vmatmul.mubr.f32.gmra.mrb[0].mxu0 %v431
      %v502 = vpop.f32.mrb[0].mxu0
      %v503 = vadd.f32 0.0, %v502
      %v504 = vpop.f32.mrb[0].mxu0
      %v505 = vadd.f32 0.0, %v504
      %506 = vmatprep.mubr.f32.mxu0 0.0
      %507 = vmatmul.mubr.f32.gmra.mrb[0].mxu0 %v434
      %v508 = vpop.f32.mrb[0].mxu0
      %v509 = vadd.f32 0.0, %v508
      %v510 = vpop.f32.mrb[0].mxu0
      %v511 = vadd.f32 0.0, %v510
      %512 = vdwg.mxu0
      %v513 = vld [vmem:[%s3] sm:$0xff]
      %v514 = vld [vmem:[%s3 + $0x8] sm:$0xff]
      %516 = vset.pattern.permute.xlu0 0
      %517 = vperm.xlu0 %516, %v513
      %v518 = vpop.permute.xlu0 %517
      %521 = vset.pattern.permute.xlu0 0
      %522 = vperm.xlu0 %521, %v514
      %v523 = vpop.permute.xlu0 %522
      %v525 = vmul.f32 %v503, %v518
      %v526 = vmul.f32 %v505, %v518
      %v527 = vmul.f32 %v509, %v523
      %v528 = vmul.f32 %v511, %v523
      %v529 = vld [vmem:[%s4] sm:$0xff]
      %v530 = vld [vmem:[%s4 + $0x8] sm:$0xff]
      %532 = vset.pattern.permute.xlu0 0
      %533 = vperm.xlu0 %532, %v529
      %v534 = vpop.permute.xlu0 %533
      %537 = vset.pattern.permute.xlu0 0
      %538 = vperm.xlu0 %537, %v530
      %v539 = vpop.permute.xlu0 %538
      %v541 = vadd.f32 %v525, %v534
      %v542 = vadd.f32 %v526, %v534
      %v543 = vadd.f32 %v527, %v539
      %v544 = vadd.f32 %v528, %v539
      %v545 = vld [vmem:[%s335] sm:$0xff]
      %v546 = vld [vmem:[%s335 + $0x8] sm:$0xff]
      %v547 = vld [vmem:[%s335 + $0x10] sm:$0xff]
      %v548 = vld [vmem:[%s335 + $0x18] sm:$0xff]
      %v549 = vadd.f32 %v541, %v545
      %v550 = vadd.f32 %v542, %v546
      %v551 = vadd.f32 %v543, %v547
      %v552 = vadd.f32 %v544, %v548
      %553 = vst [vmem:[%s345] sm:$0xff] %v549
      %554 = vst [vmem:[%s345 + $0x8] sm:$0xff] %v550
      %555 = vst [vmem:[%s345 + $0x10] sm:$0xff] %v551
      %556 = vst [vmem:[%s345 + $0x18] sm:$0xff] %v552
      %s557 = smul.u32 2, %s22
      %p558 = scmp.lt.s32.totalorder %s21, 1
      %s559 = scalar_select %p558, %s21, 1
      %p560 = scmp.lt.s32.totalorder %s557, 1
      %s561 = scalar_select %p560, %s557, 1
      %s562 = smul.addr %s559, 4
      %s563 = sadd.s32 %s561, %s562
      %s564 = smul.addr %s563, 8
      %s565 = scalar_lea.vmem %s6, %s564
      // Predicated region
      $region45: #{mobile_bottleneck.7} parent=43 // pred_check
        %p566 = pneg %p194
      $region46: #{mobile_bottleneck.7} parent=43 // pred_check_branch
        %568 = sbr.rel (%p566) target = $region48
      $region47: #{mobile_bottleneck.7} parent=43 // pred_region
        %s569 = smul.u32 2, %s22
      $region48: #{mobile_bottleneck.7} parent=43 // pred_fallthru
        _
    $region44: #{mobile_bottleneck.7} parent=5 // pred_fallthru
      _
    %p570 = scmp.le.s32.totalorder 2, %s12
    // Predicated region
    $region49: #{mobile_bottleneck.7} parent=5 // pred_check
      %p571 = pneg %p570
    $region50: #{mobile_bottleneck.7} parent=5 // pred_check_branch
      %573 = sbr.rel (%p571) target = $region52
    $region51: #{mobile_bottleneck.7} parent=5 // pred_region
      %s574 = ssub.s32 %s12, 2
      // Predicated region
      $region53: #{mobile_bottleneck.7} parent=51 // pred_check
        %p575 = pneg %p200
      $region54: #{mobile_bottleneck.7} parent=51 // pred_check_branch
        %577 = sbr.rel (%p575) target = $region56
      $region55: #{mobile_bottleneck.7} parent=51 // pred_region
        %s578 = smul.u32 2, %s24
        %p579 = scmp.lt.s32.totalorder %s23, 1
        %s580 = scalar_select %p579, %s23, 1
        %p581 = scmp.lt.s32.totalorder %s578, 1
        %s582 = scalar_select %p581, %s578, 1
        %s583 = smul.addr %s580, 4
        %s584 = sadd.s32 %s582, %s583
        %s585 = smul.addr %s584, 8
        %s586 = scalar_lea.vmem %s6, %s585
      $region56: #{mobile_bottleneck.7} parent=51 // pred_fallthru
        _
    $region52: #{mobile_bottleneck.7} parent=5 // pred_fallthru
      _
  $region6: #{mobile_bottleneck.7} parent=0 // loop_footer
    %s16 = sadd.s32 1, %s12
  $region7: #{mobile_bottleneck.7} parent=0 // loop_footer_branch
    %11 = sbr.rel target = $region3
  $region8: #{mobile_bottleneck.7} parent=0 // loop_exit
    _

</llo_original>
